<compile_context>
chip_gen: v5e
topology: v5e:2x2
jax: 0.10.0
libtpu: 0.0.40
codegen_flags: <defaults>
</compile_context>

<pallas_src>
import jax
import jax.numpy as jnp
from jax.experimental import pallas as pl
from jax.experimental.pallas import tpu as pltpu

N_INPUT = 32 * 32
N_HIDDEN = 64
N_LAYERS = 8
N_OUTPUT = 1
BN_EPS = 1e-5
N_HIDDEN_LINEARS = N_LAYERS - 1   # 7 Linear(64,64) layers, each followed by BN+ReLU
N_BN = N_LAYERS                   # 8 BatchNorm1d layers total
LANE = 128                        # padded output width (lane-dense store)


def mlp_kernel(x_ref, w0_ref, b0_ref, wh_ref, bh_ref, gamma_ref, beta_ref,
               wo_ref, bo_ref, o_ref, acc_ref):
    b = pl.program_id(0)          # batch-tile index (layer-0 only)
    k = pl.program_id(1)          # K-tile index of the first contraction
    tile_b = x_ref.shape[0]

    row0 = b * tile_b
    if tile_b % 8 == 0:           # static (trace-time) alignment hint
        row0 = pl.multiple_of(row0, 8)

    @pl.when(k == 0)
    def _init():
        acc_ref[pl.ds(row0, tile_b), :] = jnp.zeros((tile_b, N_HIDDEN), jnp.float32)

    # Partial first-layer matmul for this (batch, K) tile: bf16 in, f32 accumulate.
    acc_ref[pl.ds(row0, tile_b), :] += jnp.dot(
        x_ref[...], w0_ref[...], preferred_element_type=jnp.float32)

    @pl.when((b == pl.num_programs(0) - 1) & (k == pl.num_programs(1) - 1))
    def _finish():
        gammas = gamma_ref[...]        # (N_BN, 64) f32
        betas = beta_ref[...]          # (N_BN, 64) f32
        bhs = bh_ref[...]              # (N_HIDDEN_LINEARS, 64) f32

        def bn_relu(h, i):
            # training-mode BatchNorm1d, centered two-pass stats with gamma
            # folded into one per-column scale:
            #   hc = h - mean;  var = E[hc^2];  out = relu(hc*scale + beta)
            m1 = jnp.mean(h, axis=0, keepdims=True)
            hc = h - m1
            var = jnp.mean(hc * hc, axis=0, keepdims=True)
            scale = gammas[i:i + 1, :] * jax.lax.rsqrt(var + BN_EPS)
            return jnp.maximum(hc * scale + betas[i:i + 1, :], 0.0)

        # Linear(1024,64) epilogue -> BN -> ReLU
        h = bn_relu(acc_ref[...] + b0_ref[...], 0)

        # 7 x [Linear(64,64) -> BN -> ReLU]   (statically unrolled)
        for i in range(N_HIDDEN_LINEARS):
            z = jnp.dot(h.astype(jnp.bfloat16), wh_ref[i],
                        preferred_element_type=jnp.float32) + bhs[i:i + 1, :]
            h = bn_relu(z, i + 1)

        # Final Linear(64,1), zero-padded to 128 lanes -> unmasked full-tile
        # bf16 store (halved head writeback).
        o_ref[...] = (jnp.dot(h.astype(jnp.bfloat16), wo_ref[...],
                              preferred_element_type=jnp.float32)
                      + bo_ref[...]).astype(o_ref.dtype)


def _choose_tiles(batch):
    """Pick (tile_b, tile_k) for the layer-0 grid."""
    # Small batch: latency/overhead-bound -> single grid step, whole x resident
    # (B=1024 -> 2 MiB of bf16 x, trivially fits VMEM).
    if batch <= 1024 or batch % 8 != 0:
        return batch, N_INPUT
    # Large batch: cap VMEM at O(tile_b * tile_k), keep HBM-efficient tiles.
    tile_b = 512
    while batch % tile_b != 0:
        tile_b //= 2              # 512 -> 256 -> ... -> 8 (batch % 8 == 0 here)
    return tile_b, 512            # N_INPUT = 1024 -> 2 K steps


def _vmem_estimate_bytes(batch, tile_b, tile_k):
    x_blk = 2 * tile_b * tile_k * 2                      # double-buffered bf16
    w0_blk = 2 * tile_k * N_HIDDEN * 2
    consts = 2 * (N_HIDDEN_LINEARS * N_HIDDEN * N_HIDDEN * 2      # wh (bf16)
                  + 4 * N_BN * N_HIDDEN * 4                       # bh/gamma/beta/b0
                  + N_HIDDEN * LANE * 2 + LANE * 4)               # wo_pad / bo_pad
    acc = batch * N_HIDDEN * 4
    out = 2 * batch * LANE * 2
    epilogue = 6 * batch * N_HIDDEN * 4                  # live f32 temporaries
    return x_blk + w0_blk + consts + acc + out + epilogue


def init_params(key):
    ks = jax.random.split(key, 6)
    s_in = 1.0 / jnp.sqrt(jnp.float32(N_INPUT))
    s_h = 1.0 / jnp.sqrt(jnp.float32(N_HIDDEN))
    w0 = jax.random.uniform(ks[0], (N_INPUT, N_HIDDEN), jnp.float32, -s_in, s_in)
    b0 = jax.random.uniform(ks[1], (1, N_HIDDEN), jnp.float32, -s_in, s_in)
    wh = jax.random.uniform(ks[2], (N_HIDDEN_LINEARS, N_HIDDEN, N_HIDDEN),
                            jnp.float32, -s_h, s_h)
    bh = jax.random.uniform(ks[3], (N_HIDDEN_LINEARS, N_HIDDEN),
                            jnp.float32, -s_h, s_h)
    gamma = jnp.ones((N_BN, N_HIDDEN), jnp.float32)    # BN affine weight init
    beta = jnp.zeros((N_BN, N_HIDDEN), jnp.float32)    # BN affine bias init
    wo = jax.random.uniform(ks[4], (N_HIDDEN, N_OUTPUT), jnp.float32, -s_h, s_h)
    bo = jax.random.uniform(ks[5], (1, N_OUTPUT), jnp.float32, -s_h, s_h)
    return (w0, b0, wh, bh, gamma, beta, wo, bo)


@jax.jit
def mlp_forward(x, w0, b0, wh, bh, gamma, beta, wo, bo):
    B = x.shape[0]
    tile_b, tile_k = _choose_tiles(B)
    n_b, n_k = B // tile_b, N_INPUT // tile_k

    # bf16 activations & weights for the MXU / HBM read; in a real pipeline the
    # producer would already emit bf16 x (cast here is a no-op if it does).
    x_bf = x.astype(jnp.bfloat16)
    w0_bf = w0.astype(jnp.bfloat16)
    wh_bf = wh.astype(jnp.bfloat16)
    # Lane-dense head: zero-pad the 1-wide output projection to 128 columns.
    wo_pad = (jnp.zeros((N_HIDDEN, LANE), jnp.float32)
              .at[:, :N_OUTPUT].set(wo).astype(jnp.bfloat16))
    bo_pad = jnp.zeros((1, LANE), jnp.float32).at[:, :N_OUTPUT].set(bo)

    def const_spec(shape):
        # Constant (non-streamed) operands. (pipeline_mode=pl.Buffered(1) would
        # shave a little VMEM here; skipped as a minor, riskier tweak.)
        return pl.BlockSpec(shape, lambda b, k: (0,) * len(shape))

    cp_kwargs = {}
    est = _vmem_estimate_bytes(B, tile_b, tile_k)
    if est > 14 * 1024 * 1024:     # exceed v5e's 16 MiB scoped default -> be explicit
        cp_kwargs["vmem_limit_bytes"] = min(int(est * 3 // 2), 48 * 1024 * 1024)

    out = pl.pallas_call(
        mlp_kernel,
        out_shape=jax.ShapeDtypeStruct((B, LANE), jnp.bfloat16),
        grid_spec=pltpu.PrefetchScalarGridSpec(
            num_scalar_prefetch=0,
            grid=(n_b, n_k),
            in_specs=[
                pl.BlockSpec((tile_b, tile_k), lambda b, k: (b, k)),     # x (B,K tiled)
                pl.BlockSpec((tile_k, N_HIDDEN), lambda b, k: (k, 0)),   # w0 (K tiled)
                const_spec((1, N_HIDDEN)),                               # b0
                const_spec((N_HIDDEN_LINEARS, N_HIDDEN, N_HIDDEN)),      # wh
                const_spec((N_HIDDEN_LINEARS, N_HIDDEN)),                # bh
                const_spec((N_BN, N_HIDDEN)),                            # gamma
                const_spec((N_BN, N_HIDDEN)),                            # beta
                const_spec((N_HIDDEN, LANE)),                            # wo (padded)
                const_spec((1, LANE)),                                   # bo (padded)
            ],
            out_specs=pl.BlockSpec((B, LANE), lambda b, k: (0, 0)),
            scratch_shapes=[pltpu.VMEM((B, N_HIDDEN), jnp.float32)],
        ),
        compiler_params=pltpu.CompilerParams(
            dimension_semantics=("arbitrary", "arbitrary"), **cp_kwargs),
    )(x_bf, w0_bf, b0, wh_bf, bh, gamma, beta, wo_pad, bo_pad)

    return out[:, :N_OUTPUT].astype(jnp.float32)


def mlp_reference(x, w0, b0, wh, bh, gamma, beta, wo, bo,
                  matmul_dtype=jnp.float32):
    def dot(a, b):
        return jnp.dot(a.astype(matmul_dtype), b.astype(matmul_dtype),
                       preferred_element_type=jnp.float32)

    def bn_relu(h, i):
        mean = jnp.mean(h, axis=0, keepdims=True)
        var = jnp.mean((h - mean) ** 2, axis=0, keepdims=True)
        h = (h - mean) / jnp.sqrt(var + BN_EPS) * gamma[i] + beta[i]
        return jnp.maximum(h, 0.0)

    h = bn_relu(dot(x, w0) + b0, 0)
    for i in range(N_HIDDEN_LINEARS):
        h = bn_relu(dot(h, wh[i]) + bh[i], i + 1)
    return dot(h, wo) + bo


if __name__ == "__main__":
    key = jax.random.PRNGKey(0)
    k_x, k_p = jax.random.split(key)
    B = 8
    x = jax.random.normal(k_x, (B, N_INPUT), jnp.float32)
    params = init_params(k_p)

    out = mlp_forward(x, *params)
    jax.block_until_ready(out)
    assert out.shape == (B, N_OUTPUT)

    # Primary check: same bf16-matmul / f32-accumulate math as the kernel
    # (kernel additionally rounds the final head to bf16 on store).
    ref_bf16 = mlp_reference(x, *params, matmul_dtype=jnp.bfloat16)
    assert jnp.allclose(out, ref_bf16, rtol=1e-2, atol=1e-2)

    # Sanity check against the exact f32 forward (bf16 matmul error budget).
    ref_f32 = mlp_reference(x, *params, matmul_dtype=jnp.float32)
    assert jnp.allclose(out, ref_f32, rtol=1.5e-1, atol=1.5e-1)

    print("KERNEL_OK")
</pallas_src>

<mosaic_0001>
module attributes {stable_mosaic.version = 11 : i64} {
  func.func @mlp_kernel(%arg0: i32, %arg1: i32, %arg2: memref<8x1024xbf16, #tpu.memory_space<vmem>>, %arg3: memref<1024x64xbf16, #tpu.memory_space<vmem>>, %arg4: memref<1x64xf32, #tpu.memory_space<vmem>>, %arg5: memref<7x64x64xbf16, #tpu.memory_space<vmem>>, %arg6: memref<7x64xf32, #tpu.memory_space<vmem>>, %arg7: memref<8x64xf32, #tpu.memory_space<vmem>>, %arg8: memref<8x64xf32, #tpu.memory_space<vmem>>, %arg9: memref<64x128xbf16, #tpu.memory_space<vmem>>, %arg10: memref<1x128xf32, #tpu.memory_space<vmem>>, %arg11: memref<8x128xbf16, #tpu.memory_space<vmem>>, %arg12: memref<8x64xf32, #tpu.memory_space<vmem>>) attributes {dimension_semantics = [#tpu.dimension_semantics<arbitrary>, #tpu.dimension_semantics<arbitrary>], iteration_bounds = array<i64: 1, 1>, scalar_prefetch = 0 : i64, scratch_operands = 1 : i64, tpu.core_type = #tpu.core_type<tc>, window_params = [{transform_indices = @transform_0, window_bounds = array<i64: 8, 1024>}, {transform_indices = @transform_1, window_bounds = array<i64: 1024, 64>}, {pipeline_mode = #tpu.pipeline_mode<synchronous>, transform_indices = @transform_2, window_bounds = array<i64: 1, 64>}, {pipeline_mode = #tpu.pipeline_mode<synchronous>, transform_indices = @transform_3, window_bounds = array<i64: 7, 64, 64>}, {pipeline_mode = #tpu.pipeline_mode<synchronous>, transform_indices = @transform_4, window_bounds = array<i64: 7, 64>}, {pipeline_mode = #tpu.pipeline_mode<synchronous>, transform_indices = @transform_5, window_bounds = array<i64: 8, 64>}, {pipeline_mode = #tpu.pipeline_mode<synchronous>, transform_indices = @transform_6, window_bounds = array<i64: 8, 64>}, {pipeline_mode = #tpu.pipeline_mode<synchronous>, transform_indices = @transform_7, window_bounds = array<i64: 64, 128>}, {pipeline_mode = #tpu.pipeline_mode<synchronous>, transform_indices = @transform_8, window_bounds = array<i64: 1, 128>}, {pipeline_mode = #tpu.pipeline_mode<synchronous>, transform_indices = @transform_9, window_bounds = array<i64: 8, 128>}]} {
    %c8_i32 = arith.constant 8 : i32
    %0 = arith.muli %arg0, %c8_i32 : i32
    %1 = tpu.assume_multiple %0, 8 : i32
    %c0_i32 = arith.constant 0 : i32
    %2 = arith.cmpi eq, %arg1, %c0_i32 : i32
    %3 = arith.extui %2 : i1 to i32
    %c0_i32_0 = arith.constant 0 : i32
    %4 = arith.cmpi ne, %3, %c0_i32_0 : i32
    scf.if %4 {
      %cst_9 = arith.constant 0.000000e+00 : f32
      %18 = vector.broadcast %cst_9 : f32 to vector<8x64xf32>
      %19 = arith.index_cast %1 : i32 to index
      %c0_10 = arith.constant 0 : index
      %20 = vector.load %arg12[%19, %c0_10] : memref<8x64xf32, #tpu.memory_space<vmem>>, vector<8x64xf32>
      tpu.vector_store %arg12[%19, %c0_10], %18 {strides = array<i32>} : memref<8x64xf32, #tpu.memory_space<vmem>>, vector<8x64xf32>,
    } else {
    }
    %5 = arith.index_cast %1 : i32 to index
    %c0 = arith.constant 0 : index
    %6 = vector.load %arg12[%5, %c0] : memref<8x64xf32, #tpu.memory_space<vmem>>, vector<8x64xf32>
    %c0_1 = arith.constant 0 : index
    %c0_2 = arith.constant 0 : index
    %7 = vector.load %arg2[%c0_1, %c0_2] : memref<8x1024xbf16, #tpu.memory_space<vmem>>, vector<8x1024xbf16>
    %c0_3 = arith.constant 0 : index
    %c0_4 = arith.constant 0 : index
    %8 = vector.load %arg3[%c0_3, %c0_4] : memref<1024x64xbf16, #tpu.memory_space<vmem>>, vector<1024x64xbf16>
    %cst = arith.constant dense<0.000000e+00> : vector<8x64xf32>
    %9 = tpu.matmul %7, %8, %cst {dimension_numbers = #tpu.dot_dimension_numbers<[1], [0], [0], [1], [0, 0, 1, 1], [], []>} : vector<8x1024xbf16>, vector<1024x64xbf16>, vector<8x64xf32> -> vector<8x64xf32>
    %10 = arith.addf %6, %9 : vector<8x64xf32>
    %11 = arith.index_cast %1 : i32 to index
    %c0_5 = arith.constant 0 : index
    %12 = vector.load %arg12[%11, %c0_5] : memref<8x64xf32, #tpu.memory_space<vmem>>, vector<8x64xf32>
    tpu.vector_store %arg12[%11, %c0_5], %10 {strides = array<i32>} : memref<8x64xf32, #tpu.memory_space<vmem>>, vector<8x64xf32>,
    %c0_i32_6 = arith.constant 0 : i32
    %13 = arith.cmpi eq, %arg0, %c0_i32_6 : i32
    %c0_i32_7 = arith.constant 0 : i32
    %14 = arith.cmpi eq, %arg1, %c0_i32_7 : i32
    %15 = arith.andi %13, %14 : i1
    %16 = arith.extui %15 : i1 to i32
    %c0_i32_8 = arith.constant 0 : i32
    %17 = arith.cmpi ne, %16, %c0_i32_8 : i32
    scf.if %17 {
      %c0_9 = arith.constant 0 : index
      %c0_10 = arith.constant 0 : index
      %18 = vector.load %arg7[%c0_9, %c0_10] : memref<8x64xf32, #tpu.memory_space<vmem>>, vector<8x64xf32>
      %c0_11 = arith.constant 0 : index
      %c0_12 = arith.constant 0 : index
      %19 = vector.load %arg8[%c0_11, %c0_12] : memref<8x64xf32, #tpu.memory_space<vmem>>, vector<8x64xf32>
      %c0_13 = arith.constant 0 : index
      %c0_14 = arith.constant 0 : index
      %20 = vector.load %arg6[%c0_13, %c0_14] : memref<7x64xf32, #tpu.memory_space<vmem>>, vector<7x64xf32>
      %c0_15 = arith.constant 0 : index
      %c0_16 = arith.constant 0 : index
      %21 = vector.load %arg12[%c0_15, %c0_16] : memref<8x64xf32, #tpu.memory_space<vmem>>, vector<8x64xf32>
      %c0_17 = arith.constant 0 : index
      %c0_18 = arith.constant 0 : index
      %22 = vector.load %arg4[%c0_17, %c0_18] : memref<1x64xf32, #tpu.memory_space<vmem>>, vector<1x64xf32>
      %23 = vector.broadcast %22 : vector<1x64xf32> to vector<8x64xf32>
      %24 = arith.addf %21, %23 : vector<8x64xf32>
      %cst_19 = arith.constant dense<0.000000e+00> : vector<64xf32>
      %25 = vector.multi_reduction <add>, %24, %cst_19 [0] : vector<8x64xf32> to vector<64xf32>
      %26 = vector.shape_cast %25 : vector<64xf32> to vector<1x64xf32>
      %cst_20 = arith.constant 8.000000e+00 : f32
      %27 = vector.broadcast %cst_20 : f32 to vector<1x64xf32>
      %28 = arith.divf %26, %27 : vector<1x64xf32>
      %29 = vector.broadcast %28 : vector<1x64xf32> to vector<8x64xf32>
      %30 = arith.subf %24, %29 : vector<8x64xf32>
      %31 = arith.mulf %30, %30 : vector<8x64xf32>
      %cst_21 = arith.constant dense<0.000000e+00> : vector<64xf32>
      %32 = vector.multi_reduction <add>, %31, %cst_21 [0] : vector<8x64xf32> to vector<64xf32>
      %33 = vector.shape_cast %32 : vector<64xf32> to vector<1x64xf32>
      %cst_22 = arith.constant 8.000000e+00 : f32
      %34 = vector.broadcast %cst_22 : f32 to vector<1x64xf32>
      %35 = arith.divf %33, %34 : vector<1x64xf32>
      %36 = vector.extract_strided_slice %18 {offsets = [0, 0], sizes = [1, 64], strides = [1, 1]} : vector<8x64xf32> to vector<1x64xf32>
      %cst_23 = arith.constant 9.99999974E-6 : f32
      %37 = vector.broadcast %cst_23 : f32 to vector<1x64xf32>
      %38 = arith.addf %35, %37 : vector<1x64xf32>
      %39 = math.rsqrt %38 : vector<1x64xf32>
      %40 = arith.mulf %36, %39 : vector<1x64xf32>
      %41 = vector.broadcast %40 : vector<1x64xf32> to vector<8x64xf32>
      %42 = arith.mulf %30, %41 : vector<8x64xf32>
      %43 = vector.extract_strided_slice %19 {offsets = [0, 0], sizes = [1, 64], strides = [1, 1]} : vector<8x64xf32> to vector<1x64xf32>
      %44 = vector.broadcast %43 : vector<1x64xf32> to vector<8x64xf32>
      %45 = arith.addf %42, %44 : vector<8x64xf32>
      %cst_24 = arith.constant 0.000000e+00 : f32
      %46 = vector.broadcast %cst_24 : f32 to vector<8x64xf32>
      %47 = arith.maximumf %45, %46 : vector<8x64xf32>
      %48 = arith.truncf %47 : vector<8x64xf32> to vector<8x64xbf16>
      %c0_25 = arith.constant 0 : index
      %c0_26 = arith.constant 0 : index
      %c0_27 = arith.constant 0 : index
      %49 = vector.load %arg5[%c0_25, %c0_26, %c0_27] : memref<7x64x64xbf16, #tpu.memory_space<vmem>>, vector<1x64x64xbf16>
      %50 = vector.shape_cast %49 : vector<1x64x64xbf16> to vector<64x64xbf16>
      %cst_28 = arith.constant dense<0.000000e+00> : vector<8x64xf32>
      %51 = tpu.matmul %48, %50, %cst_28 {dimension_numbers = #tpu.dot_dimension_numbers<[1], [0], [0], [1], [0, 0, 1, 1], [], []>} : vector<8x64xbf16>, vector<64x64xbf16>, vector<8x64xf32> -> vector<8x64xf32>
      %52 = vector.extract_strided_slice %20 {offsets = [0, 0], sizes = [1, 64], strides = [1, 1]} : vector<7x64xf32> to vector<1x64xf32>
      %53 = vector.broadcast %52 : vector<1x64xf32> to vector<8x64xf32>
      %54 = arith.addf %51, %53 : vector<8x64xf32>
      %cst_29 = arith.constant dense<0.000000e+00> : vector<64xf32>
      %55 = vector.multi_reduction <add>, %54, %cst_29 [0] : vector<8x64xf32> to vector<64xf32>
      %56 = vector.shape_cast %55 : vector<64xf32> to vector<1x64xf32>
      %cst_30 = arith.constant 8.000000e+00 : f32
      %57 = vector.broadcast %cst_30 : f32 to vector<1x64xf32>
      %58 = arith.divf %56, %57 : vector<1x64xf32>
      %59 = vector.broadcast %58 : vector<1x64xf32> to vector<8x64xf32>
      %60 = arith.subf %54, %59 : vector<8x64xf32>
      %61 = arith.mulf %60, %60 : vector<8x64xf32>
      %cst_31 = arith.constant dense<0.000000e+00> : vector<64xf32>
      %62 = vector.multi_reduction <add>, %61, %cst_31 [0] : vector<8x64xf32> to vector<64xf32>
      %63 = vector.shape_cast %62 : vector<64xf32> to vector<1x64xf32>
      %cst_32 = arith.constant 8.000000e+00 : f32
      %64 = vector.broadcast %cst_32 : f32 to vector<1x64xf32>
      %65 = arith.divf %63, %64 : vector<1x64xf32>
      %66 = vector.extract_strided_slice %18 {offsets = [1, 0], sizes = [1, 64], strides = [1, 1]} : vector<8x64xf32> to vector<1x64xf32>
      %cst_33 = arith.constant 9.99999974E-6 : f32
      %67 = vector.broadcast %cst_33 : f32 to vector<1x64xf32>
      %68 = arith.addf %65, %67 : vector<1x64xf32>
      %69 = math.rsqrt %68 : vector<1x64xf32>
      %70 = arith.mulf %66, %69 : vector<1x64xf32>
      %71 = vector.broadcast %70 : vector<1x64xf32> to vector<8x64xf32>
      %72 = arith.mulf %60, %71 : vector<8x64xf32>
      %73 = vector.extract_strided_slice %19 {offsets = [1, 0], sizes = [1, 64], strides = [1, 1]} : vector<8x64xf32> to vector<1x64xf32>
      %74 = vector.broadcast %73 : vector<1x64xf32> to vector<8x64xf32>
      %75 = arith.addf %72, %74 : vector<8x64xf32>
      %cst_34 = arith.constant 0.000000e+00 : f32
      %76 = vector.broadcast %cst_34 : f32 to vector<8x64xf32>
      %77 = arith.maximumf %75, %76 : vector<8x64xf32>
      %78 = arith.truncf %77 : vector<8x64xf32> to vector<8x64xbf16>
      %c1 = arith.constant 1 : index
      %c0_35 = arith.constant 0 : index
      %c0_36 = arith.constant 0 : index
      %79 = vector.load %arg5[%c1, %c0_35, %c0_36] : memref<7x64x64xbf16, #tpu.memory_space<vmem>>, vector<1x64x64xbf16>
      %80 = vector.shape_cast %79 : vector<1x64x64xbf16> to vector<64x64xbf16>
      %cst_37 = arith.constant dense<0.000000e+00> : vector<8x64xf32>
      %81 = tpu.matmul %78, %80, %cst_37 {dimension_numbers = #tpu.dot_dimension_numbers<[1], [0], [0], [1], [0, 0, 1, 1], [], []>} : vector<8x64xbf16>, vector<64x64xbf16>, vector<8x64xf32> -> vector<8x64xf32>
      %82 = vector.extract_strided_slice %20 {offsets = [1, 0], sizes = [1, 64], strides = [1, 1]} : vector<7x64xf32> to vector<1x64xf32>
      %83 = vector.broadcast %82 : vector<1x64xf32> to vector<8x64xf32>
      %84 = arith.addf %81, %83 : vector<8x64xf32>
      %cst_38 = arith.constant dense<0.000000e+00> : vector<64xf32>
      %85 = vector.multi_reduction <add>, %84, %cst_38 [0] : vector<8x64xf32> to vector<64xf32>
      %86 = vector.shape_cast %85 : vector<64xf32> to vector<1x64xf32>
      %cst_39 = arith.constant 8.000000e+00 : f32
      %87 = vector.broadcast %cst_39 : f32 to vector<1x64xf32>
      %88 = arith.divf %86, %87 : vector<1x64xf32>
      %89 = vector.broadcast %88 : vector<1x64xf32> to vector<8x64xf32>
      %90 = arith.subf %84, %89 : vector<8x64xf32>
      %91 = arith.mulf %90, %90 : vector<8x64xf32>
      %cst_40 = arith.constant dense<0.000000e+00> : vector<64xf32>
      %92 = vector.multi_reduction <add>, %91, %cst_40 [0] : vector<8x64xf32> to vector<64xf32>
      %93 = vector.shape_cast %92 : vector<64xf32> to vector<1x64xf32>
      %cst_41 = arith.constant 8.000000e+00 : f32
      %94 = vector.broadcast %cst_41 : f32 to vector<1x64xf32>
      %95 = arith.divf %93, %94 : vector<1x64xf32>
      %96 = vector.extract_strided_slice %18 {offsets = [2, 0], sizes = [1, 64], strides = [1, 1]} : vector<8x64xf32> to vector<1x64xf32>
      %cst_42 = arith.constant 9.99999974E-6 : f32
      %97 = vector.broadcast %cst_42 : f32 to vector<1x64xf32>
      %98 = arith.addf %95, %97 : vector<1x64xf32>
      %99 = math.rsqrt %98 : vector<1x64xf32>
      %100 = arith.mulf %96, %99 : vector<1x64xf32>
      %101 = vector.broadcast %100 : vector<1x64xf32> to vector<8x64xf32>
      %102 = arith.mulf %90, %101 : vector<8x64xf32>
      %103 = vector.extract_strided_slice %19 {offsets = [2, 0], sizes = [1, 64], strides = [1, 1]} : vector<8x64xf32> to vector<1x64xf32>
      %104 = vector.broadcast %103 : vector<1x64xf32> to vector<8x64xf32>
      %105 = arith.addf %102, %104 : vector<8x64xf32>
      %cst_43 = arith.constant 0.000000e+00 : f32
      %106 = vector.broadcast %cst_43 : f32 to vector<8x64xf32>
      %107 = arith.maximumf %105, %106 : vector<8x64xf32>
      %108 = arith.truncf %107 : vector<8x64xf32> to vector<8x64xbf16>
      %c2 = arith.constant 2 : index
      %c0_44 = arith.constant 0 : index
      %c0_45 = arith.constant 0 : index
      %109 = vector.load %arg5[%c2, %c0_44, %c0_45] : memref<7x64x64xbf16, #tpu.memory_space<vmem>>, vector<1x64x64xbf16>
      %110 = vector.shape_cast %109 : vector<1x64x64xbf16> to vector<64x64xbf16>
      %cst_46 = arith.constant dense<0.000000e+00> : vector<8x64xf32>
      %111 = tpu.matmul %108, %110, %cst_46 {dimension_numbers = #tpu.dot_dimension_numbers<[1], [0], [0], [1], [0, 0, 1, 1], [], []>} : vector<8x64xbf16>, vector<64x64xbf16>, vector<8x64xf32> -> vector<8x64xf32>
      %112 = vector.extract_strided_slice %20 {offsets = [2, 0], sizes = [1, 64], strides = [1, 1]} : vector<7x64xf32> to vector<1x64xf32>
      %113 = vector.broadcast %112 : vector<1x64xf32> to vector<8x64xf32>
      %114 = arith.addf %111, %113 : vector<8x64xf32>
      %cst_47 = arith.constant dense<0.000000e+00> : vector<64xf32>
      %115 = vector.multi_reduction <add>, %114, %cst_47 [0] : vector<8x64xf32> to vector<64xf32>
      %116 = vector.shape_cast %115 : vector<64xf32> to vector<1x64xf32>
      %cst_48 = arith.constant 8.000000e+00 : f32
      %117 = vector.broadcast %cst_48 : f32 to vector<1x64xf32>
      %118 = arith.divf %116, %117 : vector<1x64xf32>
      %119 = vector.broadcast %118 : vector<1x64xf32> to vector<8x64xf32>
      %120 = arith.subf %114, %119 : vector<8x64xf32>
      %121 = arith.mulf %120, %120 : vector<8x64xf32>
      %cst_49 = arith.constant dense<0.000000e+00> : vector<64xf32>
      %122 = vector.multi_reduction <add>, %121, %cst_49 [0] : vector<8x64xf32> to vector<64xf32>
      %123 = vector.shape_cast %122 : vector<64xf32> to vector<1x64xf32>
      %cst_50 = arith.constant 8.000000e+00 : f32
      %124 = vector.broadcast %cst_50 : f32 to vector<1x64xf32>
      %125 = arith.divf %123, %124 : vector<1x64xf32>
      %126 = vector.extract_strided_slice %18 {offsets = [3, 0], sizes = [1, 64], strides = [1, 1]} : vector<8x64xf32> to vector<1x64xf32>
      %cst_51 = arith.constant 9.99999974E-6 : f32
      %127 = vector.broadcast %cst_51 : f32 to vector<1x64xf32>
      %128 = arith.addf %125, %127 : vector<1x64xf32>
      %129 = math.rsqrt %128 : vector<1x64xf32>
      %130 = arith.mulf %126, %129 : vector<1x64xf32>
      %131 = vector.broadcast %130 : vector<1x64xf32> to vector<8x64xf32>
      %132 = arith.mulf %120, %131 : vector<8x64xf32>
      %133 = vector.extract_strided_slice %19 {offsets = [3, 0], sizes = [1, 64], strides = [1, 1]} : vector<8x64xf32> to vector<1x64xf32>
      %134 = vector.broadcast %133 : vector<1x64xf32> to vector<8x64xf32>
      %135 = arith.addf %132, %134 : vector<8x64xf32>
      %cst_52 = arith.constant 0.000000e+00 : f32
      %136 = vector.broadcast %cst_52 : f32 to vector<8x64xf32>
      %137 = arith.maximumf %135, %136 : vector<8x64xf32>
      %138 = arith.truncf %137 : vector<8x64xf32> to vector<8x64xbf16>
      %c3 = arith.constant 3 : index
      %c0_53 = arith.constant 0 : index
      %c0_54 = arith.constant 0 : index
      %139 = vector.load %arg5[%c3, %c0_53, %c0_54] : memref<7x64x64xbf16, #tpu.memory_space<vmem>>, vector<1x64x64xbf16>
      %140 = vector.shape_cast %139 : vector<1x64x64xbf16> to vector<64x64xbf16>
      %cst_55 = arith.constant dense<0.000000e+00> : vector<8x64xf32>
      %141 = tpu.matmul %138, %140, %cst_55 {dimension_numbers = #tpu.dot_dimension_numbers<[1], [0], [0], [1], [0, 0, 1, 1], [], []>} : vector<8x64xbf16>, vector<64x64xbf16>, vector<8x64xf32> -> vector<8x64xf32>
      %142 = vector.extract_strided_slice %20 {offsets = [3, 0], sizes = [1, 64], strides = [1, 1]} : vector<7x64xf32> to vector<1x64xf32>
      %143 = vector.broadcast %142 : vector<1x64xf32> to vector<8x64xf32>
      %144 = arith.addf %141, %143 : vector<8x64xf32>
      %cst_56 = arith.constant dense<0.000000e+00> : vector<64xf32>
      %145 = vector.multi_reduction <add>, %144, %cst_56 [0] : vector<8x64xf32> to vector<64xf32>
      %146 = vector.shape_cast %145 : vector<64xf32> to vector<1x64xf32>
      %cst_57 = arith.constant 8.000000e+00 : f32
      %147 = vector.broadcast %cst_57 : f32 to vector<1x64xf32>
      %148 = arith.divf %146, %147 : vector<1x64xf32>
      %149 = vector.broadcast %148 : vector<1x64xf32> to vector<8x64xf32>
      %150 = arith.subf %144, %149 : vector<8x64xf32>
      %151 = arith.mulf %150, %150 : vector<8x64xf32>
      %cst_58 = arith.constant dense<0.000000e+00> : vector<64xf32>
      %152 = vector.multi_reduction <add>, %151, %cst_58 [0] : vector<8x64xf32> to vector<64xf32>
      %153 = vector.shape_cast %152 : vector<64xf32> to vector<1x64xf32>
      %cst_59 = arith.constant 8.000000e+00 : f32
      %154 = vector.broadcast %cst_59 : f32 to vector<1x64xf32>
      %155 = arith.divf %153, %154 : vector<1x64xf32>
      %156 = vector.extract_strided_slice %18 {offsets = [4, 0], sizes = [1, 64], strides = [1, 1]} : vector<8x64xf32> to vector<1x64xf32>
      %cst_60 = arith.constant 9.99999974E-6 : f32
      %157 = vector.broadcast %cst_60 : f32 to vector<1x64xf32>
      %158 = arith.addf %155, %157 : vector<1x64xf32>
      %159 = math.rsqrt %158 : vector<1x64xf32>
      %160 = arith.mulf %156, %159 : vector<1x64xf32>
      %161 = vector.broadcast %160 : vector<1x64xf32> to vector<8x64xf32>
      %162 = arith.mulf %150, %161 : vector<8x64xf32>
      %163 = vector.extract_strided_slice %19 {offsets = [4, 0], sizes = [1, 64], strides = [1, 1]} : vector<8x64xf32> to vector<1x64xf32>
      %164 = vector.broadcast %163 : vector<1x64xf32> to vector<8x64xf32>
      %165 = arith.addf %162, %164 : vector<8x64xf32>
      %cst_61 = arith.constant 0.000000e+00 : f32
      %166 = vector.broadcast %cst_61 : f32 to vector<8x64xf32>
      %167 = arith.maximumf %165, %166 : vector<8x64xf32>
      %168 = arith.truncf %167 : vector<8x64xf32> to vector<8x64xbf16>
      %c4 = arith.constant 4 : index
      %c0_62 = arith.constant 0 : index
      %c0_63 = arith.constant 0 : index
      %169 = vector.load %arg5[%c4, %c0_62, %c0_63] : memref<7x64x64xbf16, #tpu.memory_space<vmem>>, vector<1x64x64xbf16>
      %170 = vector.shape_cast %169 : vector<1x64x64xbf16> to vector<64x64xbf16>
      %cst_64 = arith.constant dense<0.000000e+00> : vector<8x64xf32>
      %171 = tpu.matmul %168, %170, %cst_64 {dimension_numbers = #tpu.dot_dimension_numbers<[1], [0], [0], [1], [0, 0, 1, 1], [], []>} : vector<8x64xbf16>, vector<64x64xbf16>, vector<8x64xf32> -> vector<8x64xf32>
      %172 = vector.extract_strided_slice %20 {offsets = [4, 0], sizes = [1, 64], strides = [1, 1]} : vector<7x64xf32> to vector<1x64xf32>
      %173 = vector.broadcast %172 : vector<1x64xf32> to vector<8x64xf32>
      %174 = arith.addf %171, %173 : vector<8x64xf32>
      %cst_65 = arith.constant dense<0.000000e+00> : vector<64xf32>
      %175 = vector.multi_reduction <add>, %174, %cst_65 [0] : vector<8x64xf32> to vector<64xf32>
      %176 = vector.shape_cast %175 : vector<64xf32> to vector<1x64xf32>
      %cst_66 = arith.constant 8.000000e+00 : f32
      %177 = vector.broadcast %cst_66 : f32 to vector<1x64xf32>
      %178 = arith.divf %176, %177 : vector<1x64xf32>
      %179 = vector.broadcast %178 : vector<1x64xf32> to vector<8x64xf32>
      %180 = arith.subf %174, %179 : vector<8x64xf32>
      %181 = arith.mulf %180, %180 : vector<8x64xf32>
      %cst_67 = arith.constant dense<0.000000e+00> : vector<64xf32>
      %182 = vector.multi_reduction <add>, %181, %cst_67 [0] : vector<8x64xf32> to vector<64xf32>
      %183 = vector.shape_cast %182 : vector<64xf32> to vector<1x64xf32>
      %cst_68 = arith.constant 8.000000e+00 : f32
      %184 = vector.broadcast %cst_68 : f32 to vector<1x64xf32>
      %185 = arith.divf %183, %184 : vector<1x64xf32>
      %186 = vector.extract_strided_slice %18 {offsets = [5, 0], sizes = [1, 64], strides = [1, 1]} : vector<8x64xf32> to vector<1x64xf32>
      %cst_69 = arith.constant 9.99999974E-6 : f32
      %187 = vector.broadcast %cst_69 : f32 to vector<1x64xf32>
      %188 = arith.addf %185, %187 : vector<1x64xf32>
      %189 = math.rsqrt %188 : vector<1x64xf32>
      %190 = arith.mulf %186, %189 : vector<1x64xf32>
      %191 = vector.broadcast %190 : vector<1x64xf32> to vector<8x64xf32>
      %192 = arith.mulf %180, %191 : vector<8x64xf32>
      %193 = vector.extract_strided_slice %19 {offsets = [5, 0], sizes = [1, 64], strides = [1, 1]} : vector<8x64xf32> to vector<1x64xf32>
      %194 = vector.broadcast %193 : vector<1x64xf32> to vector<8x64xf32>
      %195 = arith.addf %192, %194 : vector<8x64xf32>
      %cst_70 = arith.constant 0.000000e+00 : f32
      %196 = vector.broadcast %cst_70 : f32 to vector<8x64xf32>
      %197 = arith.maximumf %195, %196 : vector<8x64xf32>
      %198 = arith.truncf %197 : vector<8x64xf32> to vector<8x64xbf16>
      %c5 = arith.constant 5 : index
      %c0_71 = arith.constant 0 : index
      %c0_72 = arith.constant 0 : index
      %199 = vector.load %arg5[%c5, %c0_71, %c0_72] : memref<7x64x64xbf16, #tpu.memory_space<vmem>>, vector<1x64x64xbf16>
      %200 = vector.shape_cast %199 : vector<1x64x64xbf16> to vector<64x64xbf16>
      %cst_73 = arith.constant dense<0.000000e+00> : vector<8x64xf32>
      %201 = tpu.matmul %198, %200, %cst_73 {dimension_numbers = #tpu.dot_dimension_numbers<[1], [0], [0], [1], [0, 0, 1, 1], [], []>} : vector<8x64xbf16>, vector<64x64xbf16>, vector<8x64xf32> -> vector<8x64xf32>
      %202 = vector.extract_strided_slice %20 {offsets = [5, 0], sizes = [1, 64], strides = [1, 1]} : vector<7x64xf32> to vector<1x64xf32>
      %203 = vector.broadcast %202 : vector<1x64xf32> to vector<8x64xf32>
      %204 = arith.addf %201, %203 : vector<8x64xf32>
      %cst_74 = arith.constant dense<0.000000e+00> : vector<64xf32>
      %205 = vector.multi_reduction <add>, %204, %cst_74 [0] : vector<8x64xf32> to vector<64xf32>
      %206 = vector.shape_cast %205 : vector<64xf32> to vector<1x64xf32>
      %cst_75 = arith.constant 8.000000e+00 : f32
      %207 = vector.broadcast %cst_75 : f32 to vector<1x64xf32>
      %208 = arith.divf %206, %207 : vector<1x64xf32>
      %209 = vector.broadcast %208 : vector<1x64xf32> to vector<8x64xf32>
      %210 = arith.subf %204, %209 : vector<8x64xf32>
      %211 = arith.mulf %210, %210 : vector<8x64xf32>
      %cst_76 = arith.constant dense<0.000000e+00> : vector<64xf32>
      %212 = vector.multi_reduction <add>, %211, %cst_76 [0] : vector<8x64xf32> to vector<64xf32>
      %213 = vector.shape_cast %212 : vector<64xf32> to vector<1x64xf32>
      %cst_77 = arith.constant 8.000000e+00 : f32
      %214 = vector.broadcast %cst_77 : f32 to vector<1x64xf32>
      %215 = arith.divf %213, %214 : vector<1x64xf32>
      %216 = vector.extract_strided_slice %18 {offsets = [6, 0], sizes = [1, 64], strides = [1, 1]} : vector<8x64xf32> to vector<1x64xf32>
      %cst_78 = arith.constant 9.99999974E-6 : f32
      %217 = vector.broadcast %cst_78 : f32 to vector<1x64xf32>
      %218 = arith.addf %215, %217 : vector<1x64xf32>
      %219 = math.rsqrt %218 : vector<1x64xf32>
      %220 = arith.mulf %216, %219 : vector<1x64xf32>
      %221 = vector.broadcast %220 : vector<1x64xf32> to vector<8x64xf32>
      %222 = arith.mulf %210, %221 : vector<8x64xf32>
      %223 = vector.extract_strided_slice %19 {offsets = [6, 0], sizes = [1, 64], strides = [1, 1]} : vector<8x64xf32> to vector<1x64xf32>
      %224 = vector.broadcast %223 : vector<1x64xf32> to vector<8x64xf32>
      %225 = arith.addf %222, %224 : vector<8x64xf32>
      %cst_79 = arith.constant 0.000000e+00 : f32
      %226 = vector.broadcast %cst_79 : f32 to vector<8x64xf32>
      %227 = arith.maximumf %225, %226 : vector<8x64xf32>
      %228 = arith.truncf %227 : vector<8x64xf32> to vector<8x64xbf16>
      %c6 = arith.constant 6 : index
      %c0_80 = arith.constant 0 : index
      %c0_81 = arith.constant 0 : index
      %229 = vector.load %arg5[%c6, %c0_80, %c0_81] : memref<7x64x64xbf16, #tpu.memory_space<vmem>>, vector<1x64x64xbf16>
      %230 = vector.shape_cast %229 : vector<1x64x64xbf16> to vector<64x64xbf16>
      %cst_82 = arith.constant dense<0.000000e+00> : vector<8x64xf32>
      %231 = tpu.matmul %228, %230, %cst_82 {dimension_numbers = #tpu.dot_dimension_numbers<[1], [0], [0], [1], [0, 0, 1, 1], [], []>} : vector<8x64xbf16>, vector<64x64xbf16>, vector<8x64xf32> -> vector<8x64xf32>
      %232 = vector.extract_strided_slice %20 {offsets = [6, 0], sizes = [1, 64], strides = [1, 1]} : vector<7x64xf32> to vector<1x64xf32>
      %233 = vector.broadcast %232 : vector<1x64xf32> to vector<8x64xf32>
      %234 = arith.addf %231, %233 : vector<8x64xf32>
      %cst_83 = arith.constant dense<0.000000e+00> : vector<64xf32>
      %235 = vector.multi_reduction <add>, %234, %cst_83 [0] : vector<8x64xf32> to vector<64xf32>
      %236 = vector.shape_cast %235 : vector<64xf32> to vector<1x64xf32>
      %cst_84 = arith.constant 8.000000e+00 : f32
      %237 = vector.broadcast %cst_84 : f32 to vector<1x64xf32>
      %238 = arith.divf %236, %237 : vector<1x64xf32>
      %239 = vector.broadcast %238 : vector<1x64xf32> to vector<8x64xf32>
      %240 = arith.subf %234, %239 : vector<8x64xf32>
      %241 = arith.mulf %240, %240 : vector<8x64xf32>
      %cst_85 = arith.constant dense<0.000000e+00> : vector<64xf32>
      %242 = vector.multi_reduction <add>, %241, %cst_85 [0] : vector<8x64xf32> to vector<64xf32>
      %243 = vector.shape_cast %242 : vector<64xf32> to vector<1x64xf32>
      %cst_86 = arith.constant 8.000000e+00 : f32
      %244 = vector.broadcast %cst_86 : f32 to vector<1x64xf32>
      %245 = arith.divf %243, %244 : vector<1x64xf32>
      %246 = vector.extract_strided_slice %18 {offsets = [7, 0], sizes = [1, 64], strides = [1, 1]} : vector<8x64xf32> to vector<1x64xf32>
      %cst_87 = arith.constant 9.99999974E-6 : f32
      %247 = vector.broadcast %cst_87 : f32 to vector<1x64xf32>
      %248 = arith.addf %245, %247 : vector<1x64xf32>
      %249 = math.rsqrt %248 : vector<1x64xf32>
      %250 = arith.mulf %246, %249 : vector<1x64xf32>
      %251 = vector.broadcast %250 : vector<1x64xf32> to vector<8x64xf32>
      %252 = arith.mulf %240, %251 : vector<8x64xf32>
      %253 = vector.extract_strided_slice %19 {offsets = [7, 0], sizes = [1, 64], strides = [1, 1]} : vector<8x64xf32> to vector<1x64xf32>
      %254 = vector.broadcast %253 : vector<1x64xf32> to vector<8x64xf32>
      %255 = arith.addf %252, %254 : vector<8x64xf32>
      %cst_88 = arith.constant 0.000000e+00 : f32
      %256 = vector.broadcast %cst_88 : f32 to vector<8x64xf32>
      %257 = arith.maximumf %255, %256 : vector<8x64xf32>
      %258 = arith.truncf %257 : vector<8x64xf32> to vector<8x64xbf16>
      %c0_89 = arith.constant 0 : index
      %c0_90 = arith.constant 0 : index
      %259 = vector.load %arg9[%c0_89, %c0_90] : memref<64x128xbf16, #tpu.memory_space<vmem>>, vector<64x128xbf16>
      %cst_91 = arith.constant dense<0.000000e+00> : vector<8x128xf32>
      %260 = tpu.matmul %258, %259, %cst_91 {dimension_numbers = #tpu.dot_dimension_numbers<[1], [0], [0], [1], [0, 0, 1, 1], [], []>} : vector<8x64xbf16>, vector<64x128xbf16>, vector<8x128xf32> -> vector<8x128xf32>
      %c0_92 = arith.constant 0 : index
      %c0_93 = arith.constant 0 : index
      %261 = vector.load %arg10[%c0_92, %c0_93] : memref<1x128xf32, #tpu.memory_space<vmem>>, vector<1x128xf32>
      %262 = vector.broadcast %261 : vector<1x128xf32> to vector<8x128xf32>
      %263 = arith.addf %260, %262 : vector<8x128xf32>
      %264 = arith.truncf %263 : vector<8x128xf32> to vector<8x128xbf16>
      %c0_94 = arith.constant 0 : index
      %c0_95 = arith.constant 0 : index
      %265 = vector.load %arg11[%c0_94, %c0_95] : memref<8x128xbf16, #tpu.memory_space<vmem>>, vector<8x128xbf16>
      tpu.vector_store %arg11[%c0_94, %c0_95], %264 {strides = array<i32>} : memref<8x128xbf16, #tpu.memory_space<vmem>>, vector<8x128xbf16>,
    } else {
    }
    return
  }
  func.func @transform_0(%arg0: i32, %arg1: i32) -> (i32, i32) {
    %c0_i32 = arith.constant 0 : i32
    return %arg0, %arg1 : i32, i32
  }
  func.func @transform_1(%arg0: i32, %arg1: i32) -> (i32, i32) {
    %c0_i32 = arith.constant 0 : i32
    %c0_i32_0 = arith.constant 0 : i32
    return %arg1, %c0_i32 : i32, i32
  }
  func.func @transform_2(%arg0: i32, %arg1: i32) -> (i32, i32) {
    %c0_i32 = arith.constant 0 : i32
    %c0_i32_0 = arith.constant 0 : i32
    %c0_i32_1 = arith.constant 0 : i32
    return %c0_i32, %c0_i32_0 : i32, i32
  }
  func.func @transform_3(%arg0: i32, %arg1: i32) -> (i32, i32, i32) {
    %c0_i32 = arith.constant 0 : i32
    %c0_i32_0 = arith.constant 0 : i32
    %c0_i32_1 = arith.constant 0 : i32
    %c0_i32_2 = arith.constant 0 : i32
    return %c0_i32, %c0_i32_0, %c0_i32_1 : i32, i32, i32
  }
  func.func @transform_4(%arg0: i32, %arg1: i32) -> (i32, i32) {
    %c0_i32 = arith.constant 0 : i32
    %c0_i32_0 = arith.constant 0 : i32
    %c0_i32_1 = arith.constant 0 : i32
    return %c0_i32, %c0_i32_0 : i32, i32
  }
  func.func @transform_5(%arg0: i32, %arg1: i32) -> (i32, i32) {
    %c0_i32 = arith.constant 0 : i32
    %c0_i32_0 = arith.constant 0 : i32
    %c0_i32_1 = arith.constant 0 : i32
    return %c0_i32, %c0_i32_0 : i32, i32
  }
  func.func @transform_6(%arg0: i32, %arg1: i32) -> (i32, i32) {
    %c0_i32 = arith.constant 0 : i32
    %c0_i32_0 = arith.constant 0 : i32
    %c0_i32_1 = arith.constant 0 : i32
    return %c0_i32, %c0_i32_0 : i32, i32
  }
  func.func @transform_7(%arg0: i32, %arg1: i32) -> (i32, i32) {
    %c0_i32 = arith.constant 0 : i32
    %c0_i32_0 = arith.constant 0 : i32
    %c0_i32_1 = arith.constant 0 : i32
    return %c0_i32, %c0_i32_0 : i32, i32
  }
  func.func @transform_8(%arg0: i32, %arg1: i32) -> (i32, i32) {
    %c0_i32 = arith.constant 0 : i32
    %c0_i32_0 = arith.constant 0 : i32
    %c0_i32_1 = arith.constant 0 : i32
    return %c0_i32, %c0_i32_0 : i32, i32
  }
  func.func @transform_9(%arg0: i32, %arg1: i32) -> (i32, i32) {
    %c0_i32 = arith.constant 0 : i32
    %c0_i32_0 = arith.constant 0 : i32
    %c0_i32_1 = arith.constant 0 : i32
    return %c0_i32, %c0_i32_0 : i32, i32
  }
}

</mosaic_0001>

<llo_original>
// kernel: mlp_forward.1
$region0: #{mlp_forward.1}
  #allocation0 [shape = 'u32[]', space=smem, size = 0x4, offset = 0x4, fixed_abs, tag = 'smem constant byte address 0x4 - core index']
  #allocation1 [shape = 'u32[72,128]{1,0:T(1,128)}', space=vmem, size = 0x9000, scoped, tag = 'internal scratch']
  #allocation2 [shape = 'f32[8,64]{1,0:T(8,128)}', space=vmem, size = 0x1000, scoped, tag = 'scratch operand']
  %s0 = inlined_call_operand.vmem [shape: bf16[8,1024], index: 0, kind: input, shape index: {}]
  %s1 = inlined_call_operand.vmem [shape: bf16[1024,64], index: 1, kind: input, shape index: {}]
  %s2 = inlined_call_operand.vmem [shape: f32[1,64], index: 2, kind: input, shape index: {}]
  %s3 = inlined_call_operand.vmem [shape: bf16[7,64,64], index: 3, kind: input, shape index: {}]
  %s4 = inlined_call_operand.vmem [shape: f32[7,64], index: 4, kind: input, shape index: {}]
  %s5 = inlined_call_operand.vmem [shape: f32[8,64], index: 5, kind: input, shape index: {}]
  %s6 = inlined_call_operand.vmem [shape: f32[8,64], index: 6, kind: input, shape index: {}]
  %s7 = inlined_call_operand.vmem [shape: bf16[64,128], index: 7, kind: input, shape index: {}]
  %s8 = inlined_call_operand.vmem [shape: f32[1,128], index: 8, kind: input, shape index: {}]
  %s9 = inlined_call_operand.vmem [shape: bf16[8,128], index: 9, kind: output, shape index: {}]
  %s10 = sld [smem:[#allocation0]]
  $region54: #{mlp_forward.1} parent=0
    _
  %s12 = ssub.s32 1, %s10
  %s13 = scalar_select 0, %s12, %s10
  // Predicated region
  $region2: #{mlp_forward.1} parent=0 // pred_check
    _
  $region3: #{mlp_forward.1} parent=0 // pred_check_branch
    %15 = sbr.rel (0) target = $region5
  $region4: #{mlp_forward.1} parent=0 // pred_region
    _
  $region5: #{mlp_forward.1} parent=0 // pred_fallthru
    _
  // Predicated region
  $region6: #{mlp_forward.1} parent=0 // pred_check
    _
  $region7: #{mlp_forward.1} parent=0 // pred_check_branch
    %17 = sbr.rel (0) target = $region9
  $region8: #{mlp_forward.1} parent=0 // pred_region
    _
  $region9: #{mlp_forward.1} parent=0 // pred_fallthru
    _
  // Predicated region
  $region10: #{mlp_forward.1} parent=0 // pred_check
    _
  $region11: #{mlp_forward.1} parent=0 // pred_check_branch
    %19 = sbr.rel (0) target = $region13
  $region12: #{mlp_forward.1} parent=0 // pred_region
    _
  $region13: #{mlp_forward.1} parent=0 // pred_fallthru
    _
  // Predicated region
  $region14: #{mlp_forward.1} parent=0 // pred_check
    _
  $region15: #{mlp_forward.1} parent=0 // pred_check_branch
    %21 = sbr.rel (0) target = $region17
  $region16: #{mlp_forward.1} parent=0 // pred_region
    _
  $region17: #{mlp_forward.1} parent=0 // pred_fallthru
    _
  // Predicated region
  $region18: #{mlp_forward.1} parent=0 // pred_check
    _
  $region19: #{mlp_forward.1} parent=0 // pred_check_branch
    %23 = sbr.rel (0) target = $region21
  $region20: #{mlp_forward.1} parent=0 // pred_region
    _
  $region21: #{mlp_forward.1} parent=0 // pred_fallthru
    _
  // Predicated region
  $region22: #{mlp_forward.1} parent=0 // pred_check
    _
  $region23: #{mlp_forward.1} parent=0 // pred_check_branch
    %25 = sbr.rel (0) target = $region25
  $region24: #{mlp_forward.1} parent=0 // pred_region
    _
  $region25: #{mlp_forward.1} parent=0 // pred_fallthru
    _
  // Predicated region
  $region26: #{mlp_forward.1} parent=0 // pred_check
    _
  $region27: #{mlp_forward.1} parent=0 // pred_check_branch
    %27 = sbr.rel (0) target = $region29
  $region28: #{mlp_forward.1} parent=0 // pred_region
    _
  $region29: #{mlp_forward.1} parent=0 // pred_fallthru
    _
  // Predicated region
  $region30: #{mlp_forward.1} parent=0 // pred_check
    _
  $region31: #{mlp_forward.1} parent=0 // pred_check_branch
    %29 = sbr.rel (0) target = $region33
  $region32: #{mlp_forward.1} parent=0 // pred_region
    _
  $region33: #{mlp_forward.1} parent=0 // pred_fallthru
    _
  // Predicated region
  $region34: #{mlp_forward.1} parent=0 // pred_check
    _
  $region35: #{mlp_forward.1} parent=0 // pred_check_branch
    %31 = sbr.rel (0) target = $region37
  $region36: #{mlp_forward.1} parent=0 // pred_region
    _
  $region37: #{mlp_forward.1} parent=0 // pred_fallthru
    _
  %s33 = smul.u32 0, 8
  %p34 = scmp.eq.s32.totalorder 0, 0
  // Predicated region
  $region38: #{mlp_forward.1} parent=0 // pred_check
    %p35 = pneg %p34
  $region39: #{mlp_forward.1} parent=0 // pred_check_branch
    %37 = sbr.rel (%p35) target = $region41
  $region40: #{mlp_forward.1} parent=0 // pred_region
    %s38 = scalar_lea.vmem [#allocation2], %s33
    %vm39 = vcmask 523264
    %40 = vst.msk [vmem:[%s38] sm:$0xff] %vm39, 0.0
  $region41: #{mlp_forward.1} parent=0 // pred_fallthru
    _
  %s41 = scalar_lea.vmem [#allocation2], %s33
  %v42 = vld [vmem:[%s41] sm:$0xff]
  %v43 = vld [vmem:[%s0] sm:$0xff]
  %v44 = vld [vmem:[%s0 + $0x8] sm:$0xff]
  %v45 = vld [vmem:[%s0 + $0x10] sm:$0xff]
  %v46 = vld [vmem:[%s0 + $0x18] sm:$0xff]
  %v47 = vld [vmem:[%s1] sm:$0xf]
  %v48 = vld [vmem:[%s1 + $0x4] sm:$0xf]
  %v49 = vld [vmem:[%s1 + $0x8] sm:$0xf]
  %v50 = vld [vmem:[%s1 + $0xc] sm:$0xf]
  %v51 = vld [vmem:[%s1 + $0x10] sm:$0xf]
  %v52 = vld [vmem:[%s1 + $0x14] sm:$0xf]
  %v53 = vld [vmem:[%s1 + $0x18] sm:$0xf]
  %v54 = vld [vmem:[%s1 + $0x1c] sm:$0xf]
  %v55 = vld [vmem:[%s1 + $0x20] sm:$0xf]
  %v56 = vld [vmem:[%s1 + $0x24] sm:$0xf]
  %v57 = vld [vmem:[%s1 + $0x28] sm:$0xf]
  %v58 = vld [vmem:[%s1 + $0x2c] sm:$0xf]
  %v59 = vld [vmem:[%s1 + $0x30] sm:$0xf]
  %v60 = vld [vmem:[%s1 + $0x34] sm:$0xf]
  %v61 = vld [vmem:[%s1 + $0x38] sm:$0xf]
  %v62 = vld [vmem:[%s1 + $0x3c] sm:$0xf]
  %v63 = vld [vmem:[%s1 + $0x40] sm:$0xf]
  %v64 = vld [vmem:[%s1 + $0x44] sm:$0xf]
  %v65 = vld [vmem:[%s1 + $0x48] sm:$0xf]
  %v66 = vld [vmem:[%s1 + $0x4c] sm:$0xf]
  %v67 = vld [vmem:[%s1 + $0x50] sm:$0xf]
  %v68 = vld [vmem:[%s1 + $0x54] sm:$0xf]
  %v69 = vld [vmem:[%s1 + $0x58] sm:$0xf]
  %v70 = vld [vmem:[%s1 + $0x5c] sm:$0xf]
  %v71 = vld [vmem:[%s1 + $0x60] sm:$0xf]
  %v72 = vld [vmem:[%s1 + $0x64] sm:$0xf]
  %v73 = vld [vmem:[%s1 + $0x68] sm:$0xf]
  %v74 = vld [vmem:[%s1 + $0x6c] sm:$0xf]
  %v75 = vld [vmem:[%s1 + $0x70] sm:$0xf]
  %v76 = vld [vmem:[%s1 + $0x74] sm:$0xf]
  %v77 = vld [vmem:[%s1 + $0x78] sm:$0xf]
  %v78 = vld [vmem:[%s1 + $0x7c] sm:$0xf]
  %v79 = vld [vmem:[%s1 + $0x80] sm:$0xf]
  %v80 = vld [vmem:[%s1 + $0x84] sm:$0xf]
  %v81 = vld [vmem:[%s1 + $0x88] sm:$0xf]
  %v82 = vld [vmem:[%s1 + $0x8c] sm:$0xf]
  %v83 = vld [vmem:[%s1 + $0x90] sm:$0xf]
  %v84 = vld [vmem:[%s1 + $0x94] sm:$0xf]
  %v85 = vld [vmem:[%s1 + $0x98] sm:$0xf]
  %v86 = vld [vmem:[%s1 + $0x9c] sm:$0xf]
  %v87 = vld [vmem:[%s1 + $0xa0] sm:$0xf]
  %v88 = vld [vmem:[%s1 + $0xa4] sm:$0xf]
  %v89 = vld [vmem:[%s1 + $0xa8] sm:$0xf]
  %v90 = vld [vmem:[%s1 + $0xac] sm:$0xf]
  %v91 = vld [vmem:[%s1 + $0xb0] sm:$0xf]
  %v92 = vld [vmem:[%s1 + $0xb4] sm:$0xf]
  %v93 = vld [vmem:[%s1 + $0xb8] sm:$0xf]
  %v94 = vld [vmem:[%s1 + $0xbc] sm:$0xf]
  %v95 = vld [vmem:[%s1 + $0xc0] sm:$0xf]
  %v96 = vld [vmem:[%s1 + $0xc4] sm:$0xf]
  %v97 = vld [vmem:[%s1 + $0xc8] sm:$0xf]
  %v98 = vld [vmem:[%s1 + $0xcc] sm:$0xf]
  %v99 = vld [vmem:[%s1 + $0xd0] sm:$0xf]
  %v100 = vld [vmem:[%s1 + $0xd4] sm:$0xf]
  %v101 = vld [vmem:[%s1 + $0xd8] sm:$0xf]
  %v102 = vld [vmem:[%s1 + $0xdc] sm:$0xf]
  %v103 = vld [vmem:[%s1 + $0xe0] sm:$0xf]
  %v104 = vld [vmem:[%s1 + $0xe4] sm:$0xf]
  %v105 = vld [vmem:[%s1 + $0xe8] sm:$0xf]
  %v106 = vld [vmem:[%s1 + $0xec] sm:$0xf]
  %v107 = vld [vmem:[%s1 + $0xf0] sm:$0xf]
  %v108 = vld [vmem:[%s1 + $0xf4] sm:$0xf]
  %v109 = vld [vmem:[%s1 + $0xf8] sm:$0xf]
  %v110 = vld [vmem:[%s1 + $0xfc] sm:$0xf]
  %v111 = vld [vmem:[%s1 + $0x100] sm:$0xf]
  %v112 = vld [vmem:[%s1 + $0x104] sm:$0xf]
  %v113 = vld [vmem:[%s1 + $0x108] sm:$0xf]
  %v114 = vld [vmem:[%s1 + $0x10c] sm:$0xf]
  %v115 = vld [vmem:[%s1 + $0x110] sm:$0xf]
  %v116 = vld [vmem:[%s1 + $0x114] sm:$0xf]
  %v117 = vld [vmem:[%s1 + $0x118] sm:$0xf]
  %v118 = vld [vmem:[%s1 + $0x11c] sm:$0xf]
  %v119 = vld [vmem:[%s1 + $0x120] sm:$0xf]
  %v120 = vld [vmem:[%s1 + $0x124] sm:$0xf]
  %v121 = vld [vmem:[%s1 + $0x128] sm:$0xf]
  %v122 = vld [vmem:[%s1 + $0x12c] sm:$0xf]
  %v123 = vld [vmem:[%s1 + $0x130] sm:$0xf]
  %v124 = vld [vmem:[%s1 + $0x134] sm:$0xf]
  %v125 = vld [vmem:[%s1 + $0x138] sm:$0xf]
  %v126 = vld [vmem:[%s1 + $0x13c] sm:$0xf]
  %v127 = vld [vmem:[%s1 + $0x140] sm:$0xf]
  %v128 = vld [vmem:[%s1 + $0x144] sm:$0xf]
  %v129 = vld [vmem:[%s1 + $0x148] sm:$0xf]
  %v130 = vld [vmem:[%s1 + $0x14c] sm:$0xf]
  %v131 = vld [vmem:[%s1 + $0x150] sm:$0xf]
  %v132 = vld [vmem:[%s1 + $0x154] sm:$0xf]
  %v133 = vld [vmem:[%s1 + $0x158] sm:$0xf]
  %v134 = vld [vmem:[%s1 + $0x15c] sm:$0xf]
  %v135 = vld [vmem:[%s1 + $0x160] sm:$0xf]
  %v136 = vld [vmem:[%s1 + $0x164] sm:$0xf]
  %v137 = vld [vmem:[%s1 + $0x168] sm:$0xf]
  %v138 = vld [vmem:[%s1 + $0x16c] sm:$0xf]
  %v139 = vld [vmem:[%s1 + $0x170] sm:$0xf]
  %v140 = vld [vmem:[%s1 + $0x174] sm:$0xf]
  %v141 = vld [vmem:[%s1 + $0x178] sm:$0xf]
  %v142 = vld [vmem:[%s1 + $0x17c] sm:$0xf]
  %v143 = vld [vmem:[%s1 + $0x180] sm:$0xf]
  %v144 = vld [vmem:[%s1 + $0x184] sm:$0xf]
  %v145 = vld [vmem:[%s1 + $0x188] sm:$0xf]
  %v146 = vld [vmem:[%s1 + $0x18c] sm:$0xf]
  %v147 = vld [vmem:[%s1 + $0x190] sm:$0xf]
  %v148 = vld [vmem:[%s1 + $0x194] sm:$0xf]
  %v149 = vld [vmem:[%s1 + $0x198] sm:$0xf]
  %v150 = vld [vmem:[%s1 + $0x19c] sm:$0xf]
  %v151 = vld [vmem:[%s1 + $0x1a0] sm:$0xf]
  %v152 = vld [vmem:[%s1 + $0x1a4] sm:$0xf]
  %v153 = vld [vmem:[%s1 + $0x1a8] sm:$0xf]
  %v154 = vld [vmem:[%s1 + $0x1ac] sm:$0xf]
  %v155 = vld [vmem:[%s1 + $0x1b0] sm:$0xf]
  %v156 = vld [vmem:[%s1 + $0x1b4] sm:$0xf]
  %v157 = vld [vmem:[%s1 + $0x1b8] sm:$0xf]
  %v158 = vld [vmem:[%s1 + $0x1bc] sm:$0xf]
  %v159 = vld [vmem:[%s1 + $0x1c0] sm:$0xf]
  %v160 = vld [vmem:[%s1 + $0x1c4] sm:$0xf]
  %v161 = vld [vmem:[%s1 + $0x1c8] sm:$0xf]
  %v162 = vld [vmem:[%s1 + $0x1cc] sm:$0xf]
  %v163 = vld [vmem:[%s1 + $0x1d0] sm:$0xf]
  %v164 = vld [vmem:[%s1 + $0x1d4] sm:$0xf]
  %v165 = vld [vmem:[%s1 + $0x1d8] sm:$0xf]
  %v166 = vld [vmem:[%s1 + $0x1dc] sm:$0xf]
  %v167 = vld [vmem:[%s1 + $0x1e0] sm:$0xf]
  %v168 = vld [vmem:[%s1 + $0x1e4] sm:$0xf]
  %v169 = vld [vmem:[%s1 + $0x1e8] sm:$0xf]
  %v170 = vld [vmem:[%s1 + $0x1ec] sm:$0xf]
  %v171 = vld [vmem:[%s1 + $0x1f0] sm:$0xf]
  %v172 = vld [vmem:[%s1 + $0x1f4] sm:$0xf]
  %v173 = vld [vmem:[%s1 + $0x1f8] sm:$0xf]
  %v174 = vld [vmem:[%s1 + $0x1fc] sm:$0xf]
  %v179 = vunpack.c.l.b16 %v43
  %v180 = vunpack.c.h.b16 %v43
  %v181 = vunpack.c.l.b16 %v44
  %v182 = vunpack.c.h.b16 %v44
  %v183 = vunpack.c.l.b16 %v45
  %v184 = vunpack.c.h.b16 %v45
  %v185 = vunpack.c.l.b16 %v46
  %v186 = vunpack.c.h.b16 %v46
  %v187 = vpack.c.b16 %v179, %v179
  %v188 = vpack.c.b16 %v180, %v180
  %v189 = vpack.c.b16 %v181, %v181
  %v190 = vpack.c.b16 %v182, %v182
  %v191 = vpack.c.b16 %v183, %v183
  %v192 = vpack.c.b16 %v184, %v184
  %v193 = vpack.c.b16 %v185, %v185
  %v194 = vpack.c.b16 %v186, %v186
  %v331 = vunpack.c.l.b16 %v47
  %v332 = vunpack.c.l.b16 %v48
  %v333 = vunpack.c.l.b16 %v49
  %v334 = vunpack.c.l.b16 %v50
  %v335 = vunpack.c.l.b16 %v51
  %v336 = vunpack.c.l.b16 %v52
  %v337 = vunpack.c.l.b16 %v53
  %v338 = vunpack.c.l.b16 %v54
  %v339 = vunpack.c.l.b16 %v55
  %v340 = vunpack.c.l.b16 %v56
  %v341 = vunpack.c.l.b16 %v57
  %v342 = vunpack.c.l.b16 %v58
  %v343 = vunpack.c.l.b16 %v59
  %v344 = vunpack.c.l.b16 %v60
  %v345 = vunpack.c.l.b16 %v61
  %v346 = vunpack.c.l.b16 %v62
  %v347 = vunpack.c.l.b16 %v63
  %v348 = vunpack.c.l.b16 %v64
  %v349 = vunpack.c.l.b16 %v65
  %v350 = vunpack.c.l.b16 %v66
  %v351 = vunpack.c.l.b16 %v67
  %v352 = vunpack.c.l.b16 %v68
  %v353 = vunpack.c.l.b16 %v69
  %v354 = vunpack.c.l.b16 %v70
  %v355 = vunpack.c.l.b16 %v71
  %v356 = vunpack.c.l.b16 %v72
  %v357 = vunpack.c.l.b16 %v73
  %v358 = vunpack.c.l.b16 %v74
  %v359 = vunpack.c.l.b16 %v75
  %v360 = vunpack.c.l.b16 %v76
  %v361 = vunpack.c.l.b16 %v77
  %v362 = vunpack.c.l.b16 %v78
  %v363 = vunpack.c.l.b16 %v79
  %v364 = vunpack.c.l.b16 %v80
  %v365 = vunpack.c.l.b16 %v81
  %v366 = vunpack.c.l.b16 %v82
  %v367 = vunpack.c.l.b16 %v83
  %v368 = vunpack.c.l.b16 %v84
  %v369 = vunpack.c.l.b16 %v85
  %v370 = vunpack.c.l.b16 %v86
  %v371 = vunpack.c.l.b16 %v87
  %v372 = vunpack.c.l.b16 %v88
  %v373 = vunpack.c.l.b16 %v89
  %v374 = vunpack.c.l.b16 %v90
  %v375 = vunpack.c.l.b16 %v91
  %v376 = vunpack.c.l.b16 %v92
  %v377 = vunpack.c.l.b16 %v93
  %v378 = vunpack.c.l.b16 %v94
  %v379 = vunpack.c.l.b16 %v95
  %v380 = vunpack.c.l.b16 %v96
  %v381 = vunpack.c.l.b16 %v97
  %v382 = vunpack.c.l.b16 %v98
  %v383 = vunpack.c.l.b16 %v99
  %v384 = vunpack.c.l.b16 %v100
  %v385 = vunpack.c.l.b16 %v101
  %v386 = vunpack.c.l.b16 %v102
  %v387 = vunpack.c.l.b16 %v103
  %v388 = vunpack.c.l.b16 %v104
  %v389 = vunpack.c.l.b16 %v105
  %v390 = vunpack.c.l.b16 %v106
  %v391 = vunpack.c.l.b16 %v107
  %v392 = vunpack.c.l.b16 %v108
  %v393 = vunpack.c.l.b16 %v109
  %v394 = vunpack.c.l.b16 %v110
  %v395 = vunpack.c.l.b16 %v111
  %v396 = vunpack.c.l.b16 %v112
  %v397 = vunpack.c.l.b16 %v113
  %v398 = vunpack.c.l.b16 %v114
  %v399 = vunpack.c.l.b16 %v115
  %v400 = vunpack.c.l.b16 %v116
  %v401 = vunpack.c.l.b16 %v117
  %v402 = vunpack.c.l.b16 %v118
  %v403 = vunpack.c.l.b16 %v119
  %v404 = vunpack.c.l.b16 %v120
  %v405 = vunpack.c.l.b16 %v121
  %v406 = vunpack.c.l.b16 %v122
  %v407 = vunpack.c.l.b16 %v123
  %v408 = vunpack.c.l.b16 %v124
  %v409 = vunpack.c.l.b16 %v125
  %v410 = vunpack.c.l.b16 %v126
  %v411 = vunpack.c.l.b16 %v127
  %v412 = vunpack.c.l.b16 %v128
  %v413 = vunpack.c.l.b16 %v129
  %v414 = vunpack.c.l.b16 %v130
  %v415 = vunpack.c.l.b16 %v131
  %v416 = vunpack.c.l.b16 %v132
  %v417 = vunpack.c.l.b16 %v133
  %v418 = vunpack.c.l.b16 %v134
  %v419 = vunpack.c.l.b16 %v135
  %v420 = vunpack.c.l.b16 %v136
  %v421 = vunpack.c.l.b16 %v137
  %v422 = vunpack.c.l.b16 %v138
  %v423 = vunpack.c.l.b16 %v139
  %v424 = vunpack.c.l.b16 %v140
  %v425 = vunpack.c.l.b16 %v141
  %v426 = vunpack.c.l.b16 %v142
  %v427 = vunpack.c.l.b16 %v143
  %v428 = vunpack.c.l.b16 %v144
  %v429 = vunpack.c.l.b16 %v145
  %v430 = vunpack.c.l.b16 %v146
  %v431 = vunpack.c.l.b16 %v147
  %v432 = vunpack.c.l.b16 %v148
  %v433 = vunpack.c.l.b16 %v149
  %v434 = vunpack.c.l.b16 %v150
  %v435 = vunpack.c.l.b16 %v151
  %v436 = vunpack.c.l.b16 %v152
  %v437 = vunpack.c.l.b16 %v153
  %v438 = vunpack.c.l.b16 %v154
  %v439 = vunpack.c.l.b16 %v155
  %v440 = vunpack.c.l.b16 %v156
  %v441 = vunpack.c.l.b16 %v157
  %v442 = vunpack.c.l.b16 %v158
  %v443 = vunpack.c.l.b16 %v159
  %v444 = vunpack.c.l.b16 %v160
  %v445 = vunpack.c.l.b16 %v161
  %v446 = vunpack.c.l.b16 %v162
  %v447 = vunpack.c.l.b16 %v163
  %v448 = vunpack.c.l.b16 %v164
  %v449 = vunpack.c.l.b16 %v165
  %v450 = vunpack.c.l.b16 %v166
  %v451 = vunpack.c.l.b16 %v167
  %v452 = vunpack.c.l.b16 %v168
  %v453 = vunpack.c.l.b16 %v169
  %v454 = vunpack.c.l.b16 %v170
  %v455 = vunpack.c.l.b16 %v171
  %v456 = vunpack.c.l.b16 %v172
  %v457 = vunpack.c.l.b16 %v173
  %v458 = vunpack.c.l.b16 %v174
  %v459 = vpack.c.b16 %v332, %v331
  %v460 = vpack.c.b16 %v334, %v333
  %v461 = vpack.c.b16 %v336, %v335
  %v462 = vpack.c.b16 %v338, %v337
  %v463 = vpack.c.b16 %v340, %v339
  %v464 = vpack.c.b16 %v342, %v341
  %v465 = vpack.c.b16 %v344, %v343
  %v466 = vpack.c.b16 %v346, %v345
  %v467 = vpack.c.b16 %v348, %v347
  %v468 = vpack.c.b16 %v350, %v349
  %v469 = vpack.c.b16 %v352, %v351
  %v470 = vpack.c.b16 %v354, %v353
  %v471 = vpack.c.b16 %v356, %v355
  %v472 = vpack.c.b16 %v358, %v357
  %v473 = vpack.c.b16 %v360, %v359
  %v474 = vpack.c.b16 %v362, %v361
  %v475 = vpack.c.b16 %v364, %v363
  %v476 = vpack.c.b16 %v366, %v365
  %v477 = vpack.c.b16 %v368, %v367
  %v478 = vpack.c.b16 %v370, %v369
  %v479 = vpack.c.b16 %v372, %v371
  %v480 = vpack.c.b16 %v374, %v373
  %v481 = vpack.c.b16 %v376, %v375
  %v482 = vpack.c.b16 %v378, %v377
  %v483 = vpack.c.b16 %v380, %v379
  %v484 = vpack.c.b16 %v382, %v381
  %v485 = vpack.c.b16 %v384, %v383
  %v486 = vpack.c.b16 %v386, %v385
  %v487 = vpack.c.b16 %v388, %v387
  %v488 = vpack.c.b16 %v390, %v389
  %v489 = vpack.c.b16 %v392, %v391
  %v490 = vpack.c.b16 %v394, %v393
  %v491 = vpack.c.b16 %v396, %v395
  %v492 = vpack.c.b16 %v398, %v397
  %v493 = vpack.c.b16 %v400, %v399
  %v494 = vpack.c.b16 %v402, %v401
  %v495 = vpack.c.b16 %v404, %v403
  %v496 = vpack.c.b16 %v406, %v405
  %v497 = vpack.c.b16 %v408, %v407
  %v498 = vpack.c.b16 %v410, %v409
  %v499 = vpack.c.b16 %v412, %v411
  %v500 = vpack.c.b16 %v414, %v413
  %v501 = vpack.c.b16 %v416, %v415
  %v502 = vpack.c.b16 %v418, %v417
  %v503 = vpack.c.b16 %v420, %v419
  %v504 = vpack.c.b16 %v422, %v421
  %v505 = vpack.c.b16 %v424, %v423
  %v506 = vpack.c.b16 %v426, %v425
  %v507 = vpack.c.b16 %v428, %v427
  %v508 = vpack.c.b16 %v430, %v429
  %v509 = vpack.c.b16 %v432, %v431
  %v510 = vpack.c.b16 %v434, %v433
  %v511 = vpack.c.b16 %v436, %v435
  %v512 = vpack.c.b16 %v438, %v437
  %v513 = vpack.c.b16 %v440, %v439
  %v514 = vpack.c.b16 %v442, %v441
  %v515 = vpack.c.b16 %v444, %v443
  %v516 = vpack.c.b16 %v446, %v445
  %v517 = vpack.c.b16 %v448, %v447
  %v518 = vpack.c.b16 %v450, %v449
  %v519 = vpack.c.b16 %v452, %v451
  %v520 = vpack.c.b16 %v454, %v453
  %v521 = vpack.c.b16 %v456, %v455
  %v522 = vpack.c.b16 %v458, %v457
  %587 = vmatpush.bf16.msra.mxu0 %v466
  %588 = vmatpush.bf16.msra.mxu0 %v465
  %589 = vmatpush.bf16.msra.mxu0 %v464
  %590 = vmatpush.bf16.msra.mxu0 %v463
  %591 = vmatpush.bf16.msra.mxu0 %v462
  %592 = vmatpush.bf16.msra.mxu0 %v461
  %593 = vmatpush.bf16.msra.mxu0 %v460
  %594 = vmatpush.bf16.msra.mxu0 %v459
  %595 = vmatmul.bf16.gmra.mxu0 %v187
  %v596 = vpop.f32.mrf.mxu0
  %v597 = vadd.f32 0.0, %v596
  %v598 = vpop.f32.mrf.mxu0
  %599 = vdwg.mxu0
  %600 = vmatpush.bf16.msra.mxu0 %v474
  %601 = vmatpush.bf16.msra.mxu0 %v473
  %602 = vmatpush.bf16.msra.mxu0 %v472
  %603 = vmatpush.bf16.msra.mxu0 %v471
  %604 = vmatpush.bf16.msra.mxu0 %v470
  %605 = vmatpush.bf16.msra.mxu0 %v469
  %606 = vmatpush.bf16.msra.mxu0 %v468
  %607 = vmatpush.bf16.msra.mxu0 %v467
  %608 = vmatmul.bf16.gmra.mxu0 %v188
  %v609 = vpop.f32.mrf.mxu0
  %v610 = vadd.f32 %v597, %v609
  %v611 = vpop.f32.mrf.mxu0
  %612 = vdwg.mxu0
  %613 = vmatpush.bf16.msra.mxu0 %v482
  %614 = vmatpush.bf16.msra.mxu0 %v481
  %615 = vmatpush.bf16.msra.mxu0 %v480
  %616 = vmatpush.bf16.msra.mxu0 %v479
  %617 = vmatpush.bf16.msra.mxu0 %v478
  %618 = vmatpush.bf16.msra.mxu0 %v477
  %619 = vmatpush.bf16.msra.mxu0 %v476
  %620 = vmatpush.bf16.msra.mxu0 %v475
  %621 = vmatmul.bf16.gmra.mxu0 %v189
  %v622 = vpop.f32.mrf.mxu0
  %v623 = vadd.f32 %v610, %v622
  %v624 = vpop.f32.mrf.mxu0
  %625 = vdwg.mxu0
  %626 = vmatpush.bf16.msra.mxu0 %v490
  %627 = vmatpush.bf16.msra.mxu0 %v489
  %628 = vmatpush.bf16.msra.mxu0 %v488
  %629 = vmatpush.bf16.msra.mxu0 %v487
  %630 = vmatpush.bf16.msra.mxu0 %v486
  %631 = vmatpush.bf16.msra.mxu0 %v485
  %632 = vmatpush.bf16.msra.mxu0 %v484
  %633 = vmatpush.bf16.msra.mxu0 %v483
  %634 = vmatmul.bf16.gmra.mxu0 %v190
  %v635 = vpop.f32.mrf.mxu0
  %v636 = vadd.f32 %v623, %v635
  %v637 = vpop.f32.mrf.mxu0
  %638 = vdwg.mxu0
  %639 = vmatpush.bf16.msra.mxu0 %v498
  %640 = vmatpush.bf16.msra.mxu0 %v497
  %641 = vmatpush.bf16.msra.mxu0 %v496
  %642 = vmatpush.bf16.msra.mxu0 %v495
  %643 = vmatpush.bf16.msra.mxu0 %v494
  %644 = vmatpush.bf16.msra.mxu0 %v493
  %645 = vmatpush.bf16.msra.mxu0 %v492
  %646 = vmatpush.bf16.msra.mxu0 %v491
  %647 = vmatmul.bf16.gmra.mxu0 %v191
  %v648 = vpop.f32.mrf.mxu0
  %v649 = vadd.f32 %v636, %v648
  %v650 = vpop.f32.mrf.mxu0
  %651 = vdwg.mxu0
  %652 = vmatpush.bf16.msra.mxu0 %v506
  %653 = vmatpush.bf16.msra.mxu0 %v505
  %654 = vmatpush.bf16.msra.mxu0 %v504
  %655 = vmatpush.bf16.msra.mxu0 %v503
  %656 = vmatpush.bf16.msra.mxu0 %v502
  %657 = vmatpush.bf16.msra.mxu0 %v501
  %658 = vmatpush.bf16.msra.mxu0 %v500
  %659 = vmatpush.bf16.msra.mxu0 %v499
  %660 = vmatmul.bf16.gmra.mxu0 %v192
  %v661 = vpop.f32.mrf.mxu0
  %v662 = vadd.f32 %v649, %v661
  %v663 = vpop.f32.mrf.mxu0
  %664 = vdwg.mxu0
  %665 = vmatpush.bf16.msra.mxu0 %v514
  %666 = vmatpush.bf16.msra.mxu0 %v513
  %667 = vmatpush.bf16.msra.mxu0 %v512
  %668 = vmatpush.bf16.msra.mxu0 %v511
  %669 = vmatpush.bf16.msra.mxu0 %v510
  %670 = vmatpush.bf16.msra.mxu0 %v509
  %671 = vmatpush.bf16.msra.mxu0 %v508
  %672 = vmatpush.bf16.msra.mxu0 %v507
  %673 = vmatmul.bf16.gmra.mxu0 %v193
  %v674 = vpop.f32.mrf.mxu0
  %v675 = vadd.f32 %v662, %v674
  %v676 = vpop.f32.mrf.mxu0
  %677 = vdwg.mxu0
  %678 = vmatpush.bf16.msra.mxu0 %v522
  %679 = vmatpush.bf16.msra.mxu0 %v521
  %680 = vmatpush.bf16.msra.mxu0 %v520
  %681 = vmatpush.bf16.msra.mxu0 %v519
  %682 = vmatpush.bf16.msra.mxu0 %v518
  %683 = vmatpush.bf16.msra.mxu0 %v517
  %684 = vmatpush.bf16.msra.mxu0 %v516
  %685 = vmatpush.bf16.msra.mxu0 %v515
  %686 = vmatmul.bf16.gmra.mxu0 %v194
  %v687 = vpop.f32.mrf.mxu0
  %v688 = vadd.f32 %v675, %v687
  %v689 = vpop.f32.mrf.mxu0
  %690 = vdwg.mxu0
  %v691 = vadd.f32 %v42, %v688
  %vm692 = vcmask 523264
  %693 = vst.msk [vmem:[%s41] sm:$0xff] %vm692, %v691
  %p694 = scmp.eq.s32.totalorder 0, 0
  %p695 = pnand %p694, %p34
  %p696 = pneg %p695
  // Predicated region
  $region42: #{mlp_forward.1} parent=0 // pred_check
    _
  $region43: #{mlp_forward.1} parent=0 // pred_check_branch
    %698 = sbr.rel (%p695) target = $region45
  $region44: #{mlp_forward.1} parent=0 // pred_region
    %v699 = vld [vmem:[%s5] sm:$0xff]
    %v700 = vld [vmem:[%s6] sm:$0xff]
    %v701 = vld [vmem:[%s4] sm:$0x7f]
    %v702 = vld [vmem:[#allocation2] sm:$0xff]
    %v703 = vld [vmem:[%s2] sm:$0x1]
    %v705 = vperm.slane %v703, 0
    %v707 = vadd.f32 %v702, %v705
    %v708 = vsel %vm692, %v707, 0.0
    %v709 = vrot.slane %v708, 4
    %v710 = vadd.f32 %v708, %v709
    %v711 = vrot.slane %v710, 2
    %v712 = vadd.f32 %v710, %v711
    %v713 = vrot.slane %v712, 1
    %v714 = vadd.f32 %v712, %v713
    %v715 = vrcp.pop 8.0
    %v716 = vmul.f32 8.0, %v715
    %v717 = vsub.f32 1.0, %v716
    %v718 = vmul.f32 %v715, %v717
    %v719 = vadd.f32 %v715, %v718
    %vm720 = vweird.f32 %v715
    %v721 = vsel %vm720, %v715, %v719
    %v722 = vmul.f32 %v714, %v721
    %v723 = vsub.f32 %v707, %v722
    %v724 = vmul.f32 %v723, %v723
    %v725 = vsel %vm692, %v724, 0.0
    %v726 = vrot.slane %v725, 4
    %v727 = vadd.f32 %v725, %v726
    %v728 = vrot.slane %v727, 2
    %v729 = vadd.f32 %v727, %v728
    %v730 = vrot.slane %v729, 1
    %v731 = vadd.f32 %v729, %v730
    %v732 = vmul.f32 %v731, %v721
    %v733 = vadd.f32 %v732, 1e-05
    %v734 = vrsqrt.pop %v733
    %v735 = vmul.f32 %v734, %v733
    %v736 = vmul.f32 %v735, %v734
    %v737 = vmul.f32 0.5, %v736
    %v738 = vsub.f32 1.5, %v737
    %v739 = vmul.f32 %v734, %v738
    %vm740 = vweird.f32 %v733
    %vm741 = vweird.f32 %v734
    %vm742 = vmor %vm740, %vm741
    %v743 = vsel %vm742, %v734, %v739
    %v744 = vmul.f32 %v699, %v743
    %v745 = vperm.slane %v744, 0
    %v746 = vmul.f32 %v723, %v745
    %v747 = vperm.slane %v700, 0
    %v748 = vadd.f32 %v746, %v747
    %v749 = vmax.f32 %v748, 0.0
    %v750 = vpack.c.bf16 %v749, %v749
    %v751 = vld [vmem:[%s3] sm:$0xf]
    %v752 = vld [vmem:[%s3 + $0x4] sm:$0xf]
    %v753 = vld [vmem:[%s3 + $0x8] sm:$0xf]
    %v754 = vld [vmem:[%s3 + $0xc] sm:$0xf]
    %v755 = vld [vmem:[%s3 + $0x10] sm:$0xf]
    %v756 = vld [vmem:[%s3 + $0x14] sm:$0xf]
    %v757 = vld [vmem:[%s3 + $0x18] sm:$0xf]
    %v758 = vld [vmem:[%s3 + $0x1c] sm:$0xf]
    %v759 = vperm.slane %v701, 0
    %v768 = vunpack.c.l.b16 %v751
    %v769 = vunpack.c.l.b16 %v752
    %v770 = vunpack.c.l.b16 %v753
    %v771 = vunpack.c.l.b16 %v754
    %v772 = vunpack.c.l.b16 %v755
    %v773 = vunpack.c.l.b16 %v756
    %v774 = vunpack.c.l.b16 %v757
    %v775 = vunpack.c.l.b16 %v758
    %v776 = vpack.c.b16 %v769, %v768
    %v777 = vpack.c.b16 %v771, %v770
    %v778 = vpack.c.b16 %v773, %v772
    %v779 = vpack.c.b16 %v775, %v774
    %v785 = vsel %vm692, %v750, 0
    %787 = vmatpush.bf16.msra.mxu0 0
    %788 = vmatpush.bf16.msra.mxu0 0
    %789 = vmatpush.bf16.msra.mxu0 0
    %790 = vmatpush.bf16.msra.mxu0 0
    %791 = vmatpush.bf16.msra.mxu0 %v779
    %792 = vmatpush.bf16.msra.mxu0 %v778
    %793 = vmatpush.bf16.msra.mxu0 %v777
    %794 = vmatpush.bf16.msra.mxu0 %v776
    %795 = vmatmul.bf16.gmra.mxu0 %v785
    %v796 = vpop.f32.mrf.mxu0
    %v797 = vadd.f32 %v759, %v796
    %v798 = vpop.f32.mrf.mxu0
    %799 = vdwg.mxu0
    %v800 = vsel %vm692, %v797, 0.0
    %v801 = vrot.slane %v800, 4
    %v802 = vadd.f32 %v800, %v801
    %v803 = vrot.slane %v802, 2
    %v804 = vadd.f32 %v802, %v803
    %v805 = vrot.slane %v804, 1
    %v806 = vadd.f32 %v804, %v805
    %v807 = vmul.f32 %v806, %v721
    %v808 = vsub.f32 %v797, %v807
    %v809 = vmul.f32 %v808, %v808
    %v810 = vsel %vm692, %v809, 0.0
    %v811 = vrot.slane %v810, 4
    %v812 = vadd.f32 %v810, %v811
    %v813 = vrot.slane %v812, 2
    %v814 = vadd.f32 %v812, %v813
    %v815 = vrot.slane %v814, 1
    %v816 = vadd.f32 %v814, %v815
    %v817 = vmul.f32 %v816, %v721
    %v818 = vadd.f32 %v817, 1e-05
    %v819 = vrsqrt.pop %v818
    %v820 = vmul.f32 %v819, %v818
    %v821 = vmul.f32 %v820, %v819
    %v822 = vmul.f32 0.5, %v821
    %v823 = vsub.f32 1.5, %v822
    %v824 = vmul.f32 %v819, %v823
    %vm825 = vweird.f32 %v818
    %vm826 = vweird.f32 %v819
    %vm827 = vmor %vm825, %vm826
    %v828 = vsel %vm827, %v819, %v824
    %v829 = vmul.f32 %v699, %v828
    %v830 = vperm.slane %v829, 1
    %v831 = vmul.f32 %v808, %v830
    %v832 = vperm.slane %v700, 1
    %v833 = vadd.f32 %v831, %v832
    %v834 = vmax.f32 %v833, 0.0
    %v835 = vpack.c.bf16 %v834, %v834
    %s836 = scalar_lea.vmem %s3, 32
    %v837 = vld [vmem:[%s836] sm:$0xf]
    %v838 = vld [vmem:[%s836 + $0x4] sm:$0xf]
    %v839 = vld [vmem:[%s836 + $0x8] sm:$0xf]
    %v840 = vld [vmem:[%s836 + $0xc] sm:$0xf]
    %v841 = vld [vmem:[%s836 + $0x10] sm:$0xf]
    %v842 = vld [vmem:[%s836 + $0x14] sm:$0xf]
    %v843 = vld [vmem:[%s836 + $0x18] sm:$0xf]
    %v844 = vld [vmem:[%s836 + $0x1c] sm:$0xf]
    %v845 = vperm.slane %v701, 1
    %v854 = vunpack.c.l.b16 %v837
    %v855 = vunpack.c.l.b16 %v838
    %v856 = vunpack.c.l.b16 %v839
    %v857 = vunpack.c.l.b16 %v840
    %v858 = vunpack.c.l.b16 %v841
    %v859 = vunpack.c.l.b16 %v842
    %v860 = vunpack.c.l.b16 %v843
    %v861 = vunpack.c.l.b16 %v844
    %v862 = vpack.c.b16 %v855, %v854
    %v863 = vpack.c.b16 %v857, %v856
    %v864 = vpack.c.b16 %v859, %v858
    %v865 = vpack.c.b16 %v861, %v860
    %v871 = vsel %vm692, %v835, 0
    %873 = vmatpush.bf16.msra.mxu0 0
    %874 = vmatpush.bf16.msra.mxu0 0
    %875 = vmatpush.bf16.msra.mxu0 0
    %876 = vmatpush.bf16.msra.mxu0 0
    %877 = vmatpush.bf16.msra.mxu0 %v865
    %878 = vmatpush.bf16.msra.mxu0 %v864
    %879 = vmatpush.bf16.msra.mxu0 %v863
    %880 = vmatpush.bf16.msra.mxu0 %v862
    %881 = vmatmul.bf16.gmra.mxu0 %v871
    %v882 = vpop.f32.mrf.mxu0
    %v883 = vadd.f32 %v845, %v882
    %v884 = vpop.f32.mrf.mxu0
    %885 = vdwg.mxu0
    %v886 = vsel %vm692, %v883, 0.0
    %v887 = vrot.slane %v886, 4
    %v888 = vadd.f32 %v886, %v887
    %v889 = vrot.slane %v888, 2
    %v890 = vadd.f32 %v888, %v889
    %v891 = vrot.slane %v890, 1
    %v892 = vadd.f32 %v890, %v891
    %v893 = vmul.f32 %v892, %v721
    %v894 = vsub.f32 %v883, %v893
    %v895 = vmul.f32 %v894, %v894
    %v896 = vsel %vm692, %v895, 0.0
    %v897 = vrot.slane %v896, 4
    %v898 = vadd.f32 %v896, %v897
    %v899 = vrot.slane %v898, 2
    %v900 = vadd.f32 %v898, %v899
    %v901 = vrot.slane %v900, 1
    %v902 = vadd.f32 %v900, %v901
    %v903 = vmul.f32 %v902, %v721
    %v904 = vadd.f32 %v903, 1e-05
    %v905 = vrsqrt.pop %v904
    %v906 = vmul.f32 %v905, %v904
    %v907 = vmul.f32 %v906, %v905
    %v908 = vmul.f32 0.5, %v907
    %v909 = vsub.f32 1.5, %v908
    %v910 = vmul.f32 %v905, %v909
    %vm911 = vweird.f32 %v904
    %vm912 = vweird.f32 %v905
    %vm913 = vmor %vm911, %vm912
    %v914 = vsel %vm913, %v905, %v910
    %v915 = vmul.f32 %v699, %v914
    %v916 = vperm.slane %v915, 2
    %v917 = vmul.f32 %v894, %v916
    %v918 = vperm.slane %v700, 2
    %v919 = vadd.f32 %v917, %v918
    %v920 = vmax.f32 %v919, 0.0
    %v921 = vpack.c.bf16 %v920, %v920
    %s922 = scalar_lea.vmem %s3, 64
    %v923 = vld [vmem:[%s922] sm:$0xf]
    %v924 = vld [vmem:[%s922 + $0x4] sm:$0xf]
    %v925 = vld [vmem:[%s922 + $0x8] sm:$0xf]
    %v926 = vld [vmem:[%s922 + $0xc] sm:$0xf]
    %v927 = vld [vmem:[%s922 + $0x10] sm:$0xf]
    %v928 = vld [vmem:[%s922 + $0x14] sm:$0xf]
    %v929 = vld [vmem:[%s922 + $0x18] sm:$0xf]
    %v930 = vld [vmem:[%s922 + $0x1c] sm:$0xf]
    %v931 = vperm.slane %v701, 2
    %v940 = vunpack.c.l.b16 %v923
    %v941 = vunpack.c.l.b16 %v924
    %v942 = vunpack.c.l.b16 %v925
    %v943 = vunpack.c.l.b16 %v926
    %v944 = vunpack.c.l.b16 %v927
    %v945 = vunpack.c.l.b16 %v928
    %v946 = vunpack.c.l.b16 %v929
    %v947 = vunpack.c.l.b16 %v930
    %v948 = vpack.c.b16 %v941, %v940
    %v949 = vpack.c.b16 %v943, %v942
    %v950 = vpack.c.b16 %v945, %v944
    %v951 = vpack.c.b16 %v947, %v946
    %v957 = vsel %vm692, %v921, 0
    %959 = vmatpush.bf16.msra.mxu0 0
    %960 = vmatpush.bf16.msra.mxu0 0
    %961 = vmatpush.bf16.msra.mxu0 0
    %962 = vmatpush.bf16.msra.mxu0 0
    %963 = vmatpush.bf16.msra.mxu0 %v951
    %964 = vmatpush.bf16.msra.mxu0 %v950
    %965 = vmatpush.bf16.msra.mxu0 %v949
    %966 = vmatpush.bf16.msra.mxu0 %v948
    %967 = vmatmul.bf16.gmra.mxu0 %v957
    %v968 = vpop.f32.mrf.mxu0
    %v969 = vadd.f32 %v931, %v968
    %v970 = vpop.f32.mrf.mxu0
    %971 = vdwg.mxu0
    %v972 = vsel %vm692, %v969, 0.0
    %v973 = vrot.slane %v972, 4
    %v974 = vadd.f32 %v972, %v973
    %v975 = vrot.slane %v974, 2
    %v976 = vadd.f32 %v974, %v975
    %v977 = vrot.slane %v976, 1
    %v978 = vadd.f32 %v976, %v977
    %v979 = vmul.f32 %v978, %v721
    %v980 = vsub.f32 %v969, %v979
    %v981 = vmul.f32 %v980, %v980
    %v982 = vsel %vm692, %v981, 0.0
    %v983 = vrot.slane %v982, 4
    %v984 = vadd.f32 %v982, %v983
    %v985 = vrot.slane %v984, 2
    %v986 = vadd.f32 %v984, %v985
    %v987 = vrot.slane %v986, 1
    %v988 = vadd.f32 %v986, %v987
    %v989 = vmul.f32 %v988, %v721
    %v990 = vadd.f32 %v989, 1e-05
    %v991 = vrsqrt.pop %v990
    %v992 = vmul.f32 %v991, %v990
    %v993 = vmul.f32 %v992, %v991
    %v994 = vmul.f32 0.5, %v993
    %v995 = vsub.f32 1.5, %v994
    %v996 = vmul.f32 %v991, %v995
    %vm997 = vweird.f32 %v990
    %vm998 = vweird.f32 %v991
    %vm999 = vmor %vm997, %vm998
    %v1000 = vsel %vm999, %v991, %v996
    %v1001 = vmul.f32 %v699, %v1000
    %v1002 = vperm.slane %v1001, 3
    %v1003 = vmul.f32 %v980, %v1002
    %v1004 = vperm.slane %v700, 3
    %v1005 = vadd.f32 %v1003, %v1004
    %v1006 = vmax.f32 %v1005, 0.0
    %v1007 = vpack.c.bf16 %v1006, %v1006
    %s1008 = scalar_lea.vmem %s3, 96
    %v1009 = vld [vmem:[%s1008] sm:$0xf]
    %v1010 = vld [vmem:[%s1008 + $0x4] sm:$0xf]
    %v1011 = vld [vmem:[%s1008 + $0x8] sm:$0xf]
    %v1012 = vld [vmem:[%s1008 + $0xc] sm:$0xf]
    %v1013 = vld [vmem:[%s1008 + $0x10] sm:$0xf]
    %v1014 = vld [vmem:[%s1008 + $0x14] sm:$0xf]
    %v1015 = vld [vmem:[%s1008 + $0x18] sm:$0xf]
    %v1016 = vld [vmem:[%s1008 + $0x1c] sm:$0xf]
    %v1017 = vperm.slane %v701, 3
    %v1026 = vunpack.c.l.b16 %v1009
    %v1027 = vunpack.c.l.b16 %v1010
    %v1028 = vunpack.c.l.b16 %v1011
    %v1029 = vunpack.c.l.b16 %v1012
    %v1030 = vunpack.c.l.b16 %v1013
    %v1031 = vunpack.c.l.b16 %v1014
    %v1032 = vunpack.c.l.b16 %v1015
    %v1033 = vunpack.c.l.b16 %v1016
    %v1034 = vpack.c.b16 %v1027, %v1026
    %v1035 = vpack.c.b16 %v1029, %v1028
    %v1036 = vpack.c.b16 %v1031, %v1030
    %v1037 = vpack.c.b16 %v1033, %v1032
    %v1043 = vsel %vm692, %v1007, 0
    %1045 = vmatpush.bf16.msra.mxu0 0
    %1046 = vmatpush.bf16.msra.mxu0 0
    %1047 = vmatpush.bf16.msra.mxu0 0
    %1048 = vmatpush.bf16.msra.mxu0 0
    %1049 = vmatpush.bf16.msra.mxu0 %v1037
    %1050 = vmatpush.bf16.msra.mxu0 %v1036
    %1051 = vmatpush.bf16.msra.mxu0 %v1035
    %1052 = vmatpush.bf16.msra.mxu0 %v1034
    %1053 = vmatmul.bf16.gmra.mxu0 %v1043
    %v1054 = vpop.f32.mrf.mxu0
    %v1055 = vadd.f32 %v1017, %v1054
    %v1056 = vpop.f32.mrf.mxu0
    %1057 = vdwg.mxu0
    %v1058 = vsel %vm692, %v1055, 0.0
    %v1059 = vrot.slane %v1058, 4
    %v1060 = vadd.f32 %v1058, %v1059
    %v1061 = vrot.slane %v1060, 2
    %v1062 = vadd.f32 %v1060, %v1061
    %v1063 = vrot.slane %v1062, 1
    %v1064 = vadd.f32 %v1062, %v1063
    %v1065 = vmul.f32 %v1064, %v721
    %v1066 = vsub.f32 %v1055, %v1065
    %v1067 = vmul.f32 %v1066, %v1066
    %v1068 = vsel %vm692, %v1067, 0.0
    %v1069 = vrot.slane %v1068, 4
    %v1070 = vadd.f32 %v1068, %v1069
    %v1071 = vrot.slane %v1070, 2
    %v1072 = vadd.f32 %v1070, %v1071
    %v1073 = vrot.slane %v1072, 1
    %v1074 = vadd.f32 %v1072, %v1073
    %v1075 = vmul.f32 %v1074, %v721
    %v1076 = vadd.f32 %v1075, 1e-05
    %v1077 = vrsqrt.pop %v1076
    %v1078 = vmul.f32 %v1077, %v1076
    %v1079 = vmul.f32 %v1078, %v1077
    %v1080 = vmul.f32 0.5, %v1079
    %v1081 = vsub.f32 1.5, %v1080
    %v1082 = vmul.f32 %v1077, %v1081
    %vm1083 = vweird.f32 %v1076
    %vm1084 = vweird.f32 %v1077
    %vm1085 = vmor %vm1083, %vm1084
    %v1086 = vsel %vm1085, %v1077, %v1082
    %v1087 = vmul.f32 %v699, %v1086
    %v1088 = vperm.slane %v1087, 4
    %v1089 = vmul.f32 %v1066, %v1088
    %v1090 = vperm.slane %v700, 4
    %v1091 = vadd.f32 %v1089, %v1090
    %v1092 = vmax.f32 %v1091, 0.0
    %v1093 = vpack.c.bf16 %v1092, %v1092
    %s1094 = scalar_lea.vmem %s3, 128
    %v1095 = vld [vmem:[%s1094] sm:$0xf]
    %v1096 = vld [vmem:[%s1094 + $0x4] sm:$0xf]
    %v1097 = vld [vmem:[%s1094 + $0x8] sm:$0xf]
    %v1098 = vld [vmem:[%s1094 + $0xc] sm:$0xf]
    %v1099 = vld [vmem:[%s1094 + $0x10] sm:$0xf]
    %v1100 = vld [vmem:[%s1094 + $0x14] sm:$0xf]
    %v1101 = vld [vmem:[%s1094 + $0x18] sm:$0xf]
    %v1102 = vld [vmem:[%s1094 + $0x1c] sm:$0xf]
    %v1103 = vperm.slane %v701, 4
    %v1112 = vunpack.c.l.b16 %v1095
    %v1113 = vunpack.c.l.b16 %v1096
    %v1114 = vunpack.c.l.b16 %v1097
    %v1115 = vunpack.c.l.b16 %v1098
    %v1116 = vunpack.c.l.b16 %v1099
    %v1117 = vunpack.c.l.b16 %v1100
    %v1118 = vunpack.c.l.b16 %v1101
    %v1119 = vunpack.c.l.b16 %v1102
    %v1120 = vpack.c.b16 %v1113, %v1112
    %v1121 = vpack.c.b16 %v1115, %v1114
    %v1122 = vpack.c.b16 %v1117, %v1116
    %v1123 = vpack.c.b16 %v1119, %v1118
    %v1129 = vsel %vm692, %v1093, 0
    %1131 = vmatpush.bf16.msra.mxu0 0
    %1132 = vmatpush.bf16.msra.mxu0 0
    %1133 = vmatpush.bf16.msra.mxu0 0
    %1134 = vmatpush.bf16.msra.mxu0 0
    %1135 = vmatpush.bf16.msra.mxu0 %v1123
    %1136 = vmatpush.bf16.msra.mxu0 %v1122
    %1137 = vmatpush.bf16.msra.mxu0 %v1121
    %1138 = vmatpush.bf16.msra.mxu0 %v1120
    %1139 = vmatmul.bf16.gmra.mxu0 %v1129
    %v1140 = vpop.f32.mrf.mxu0
    %v1141 = vadd.f32 %v1103, %v1140
    %v1142 = vpop.f32.mrf.mxu0
    %1143 = vdwg.mxu0
    %v1144 = vsel %vm692, %v1141, 0.0
    %v1145 = vrot.slane %v1144, 4
    %v1146 = vadd.f32 %v1144, %v1145
    %v1147 = vrot.slane %v1146, 2
    %v1148 = vadd.f32 %v1146, %v1147
    %v1149 = vrot.slane %v1148, 1
    %v1150 = vadd.f32 %v1148, %v1149
    %v1151 = vmul.f32 %v1150, %v721
    %v1152 = vsub.f32 %v1141, %v1151
    %v1153 = vmul.f32 %v1152, %v1152
    %v1154 = vsel %vm692, %v1153, 0.0
    %v1155 = vrot.slane %v1154, 4
    %v1156 = vadd.f32 %v1154, %v1155
    %v1157 = vrot.slane %v1156, 2
    %v1158 = vadd.f32 %v1156, %v1157
    %v1159 = vrot.slane %v1158, 1
    %v1160 = vadd.f32 %v1158, %v1159
    %v1161 = vmul.f32 %v1160, %v721
    %v1162 = vadd.f32 %v1161, 1e-05
    %v1163 = vrsqrt.pop %v1162
    %v1164 = vmul.f32 %v1163, %v1162
    %v1165 = vmul.f32 %v1164, %v1163
    %v1166 = vmul.f32 0.5, %v1165
    %v1167 = vsub.f32 1.5, %v1166
    %v1168 = vmul.f32 %v1163, %v1167
    %vm1169 = vweird.f32 %v1162
    %vm1170 = vweird.f32 %v1163
    %vm1171 = vmor %vm1169, %vm1170
    %v1172 = vsel %vm1171, %v1163, %v1168
    %v1173 = vmul.f32 %v699, %v1172
    %v1174 = vperm.slane %v1173, 5
    %v1175 = vmul.f32 %v1152, %v1174
    %v1176 = vperm.slane %v700, 5
    %v1177 = vadd.f32 %v1175, %v1176
    %v1178 = vmax.f32 %v1177, 0.0
    %v1179 = vpack.c.bf16 %v1178, %v1178
    %s1180 = scalar_lea.vmem %s3, 160
    %v1181 = vld [vmem:[%s1180] sm:$0xf]
    %v1182 = vld [vmem:[%s1180 + $0x4] sm:$0xf]
    %v1183 = vld [vmem:[%s1180 + $0x8] sm:$0xf]
    %v1184 = vld [vmem:[%s1180 + $0xc] sm:$0xf]
    %v1185 = vld [vmem:[%s1180 + $0x10] sm:$0xf]
    %v1186 = vld [vmem:[%s1180 + $0x14] sm:$0xf]
    %v1187 = vld [vmem:[%s1180 + $0x18] sm:$0xf]
    %v1188 = vld [vmem:[%s1180 + $0x1c] sm:$0xf]
    %v1189 = vperm.slane %v701, 5
    %v1198 = vunpack.c.l.b16 %v1181
    %v1199 = vunpack.c.l.b16 %v1182
    %v1200 = vunpack.c.l.b16 %v1183
    %v1201 = vunpack.c.l.b16 %v1184
    %v1202 = vunpack.c.l.b16 %v1185
    %v1203 = vunpack.c.l.b16 %v1186
    %v1204 = vunpack.c.l.b16 %v1187
    %v1205 = vunpack.c.l.b16 %v1188
    %v1206 = vpack.c.b16 %v1199, %v1198
    %v1207 = vpack.c.b16 %v1201, %v1200
    %v1208 = vpack.c.b16 %v1203, %v1202
    %v1209 = vpack.c.b16 %v1205, %v1204
    %v1215 = vsel %vm692, %v1179, 0
    %1217 = vmatpush.bf16.msra.mxu0 0
    %1218 = vmatpush.bf16.msra.mxu0 0
    %1219 = vmatpush.bf16.msra.mxu0 0
    %1220 = vmatpush.bf16.msra.mxu0 0
    %1221 = vmatpush.bf16.msra.mxu0 %v1209
    %1222 = vmatpush.bf16.msra.mxu0 %v1208
    %1223 = vmatpush.bf16.msra.mxu0 %v1207
    %1224 = vmatpush.bf16.msra.mxu0 %v1206
    %1225 = vmatmul.bf16.gmra.mxu0 %v1215
    %v1226 = vpop.f32.mrf.mxu0
    %v1227 = vadd.f32 %v1189, %v1226
    %v1228 = vpop.f32.mrf.mxu0
    %1229 = vdwg.mxu0
    %v1230 = vsel %vm692, %v1227, 0.0
    %v1231 = vrot.slane %v1230, 4
    %v1232 = vadd.f32 %v1230, %v1231
    %v1233 = vrot.slane %v1232, 2
    %v1234 = vadd.f32 %v1232, %v1233
    %v1235 = vrot.slane %v1234, 1
    %v1236 = vadd.f32 %v1234, %v1235
    %v1237 = vmul.f32 %v1236, %v721
    %v1238 = vsub.f32 %v1227, %v1237
    %v1239 = vmul.f32 %v1238, %v1238
    %v1240 = vsel %vm692, %v1239, 0.0
    %v1241 = vrot.slane %v1240, 4
    %v1242 = vadd.f32 %v1240, %v1241
    %v1243 = vrot.slane %v1242, 2
    %v1244 = vadd.f32 %v1242, %v1243
    %v1245 = vrot.slane %v1244, 1
    %v1246 = vadd.f32 %v1244, %v1245
    %v1247 = vmul.f32 %v1246, %v721
    %v1248 = vadd.f32 %v1247, 1e-05
    %v1249 = vrsqrt.pop %v1248
    %v1250 = vmul.f32 %v1249, %v1248
    %v1251 = vmul.f32 %v1250, %v1249
    %v1252 = vmul.f32 0.5, %v1251
    %v1253 = vsub.f32 1.5, %v1252
    %v1254 = vmul.f32 %v1249, %v1253
    %vm1255 = vweird.f32 %v1248
    %vm1256 = vweird.f32 %v1249
    %vm1257 = vmor %vm1255, %vm1256
    %v1258 = vsel %vm1257, %v1249, %v1254
    %v1259 = vmul.f32 %v699, %v1258
    %v1260 = vperm.slane %v1259, 6
    %v1261 = vmul.f32 %v1238, %v1260
    %v1262 = vperm.slane %v700, 6
    %v1263 = vadd.f32 %v1261, %v1262
    %v1264 = vmax.f32 %v1263, 0.0
    %v1265 = vpack.c.bf16 %v1264, %v1264
    %s1266 = scalar_lea.vmem %s3, 192
    %v1267 = vld [vmem:[%s1266] sm:$0xf]
    %v1268 = vld [vmem:[%s1266 + $0x4] sm:$0xf]
    %v1269 = vld [vmem:[%s1266 + $0x8] sm:$0xf]
    %v1270 = vld [vmem:[%s1266 + $0xc] sm:$0xf]
    %v1271 = vld [vmem:[%s1266 + $0x10] sm:$0xf]
    %v1272 = vld [vmem:[%s1266 + $0x14] sm:$0xf]
    %v1273 = vld [vmem:[%s1266 + $0x18] sm:$0xf]
    %v1274 = vld [vmem:[%s1266 + $0x1c] sm:$0xf]
    %v1275 = vperm.slane %v701, 6
    %v1284 = vunpack.c.l.b16 %v1267
    %v1285 = vunpack.c.l.b16 %v1268
    %v1286 = vunpack.c.l.b16 %v1269
    %v1287 = vunpack.c.l.b16 %v1270
    %v1288 = vunpack.c.l.b16 %v1271
    %v1289 = vunpack.c.l.b16 %v1272
    %v1290 = vunpack.c.l.b16 %v1273
    %v1291 = vunpack.c.l.b16 %v1274
    %v1292 = vpack.c.b16 %v1285, %v1284
    %v1293 = vpack.c.b16 %v1287, %v1286
    %v1294 = vpack.c.b16 %v1289, %v1288
    %v1295 = vpack.c.b16 %v1291, %v1290
    %v1301 = vsel %vm692, %v1265, 0
    %1303 = vmatpush.bf16.msra.mxu0 0
    %1304 = vmatpush.bf16.msra.mxu0 0
    %1305 = vmatpush.bf16.msra.mxu0 0
    %1306 = vmatpush.bf16.msra.mxu0 0
    %1307 = vmatpush.bf16.msra.mxu0 %v1295
    %1308 = vmatpush.bf16.msra.mxu0 %v1294
    %1309 = vmatpush.bf16.msra.mxu0 %v1293
    %1310 = vmatpush.bf16.msra.mxu0 %v1292
    %1311 = vmatmul.bf16.gmra.mxu0 %v1301
    %v1312 = vpop.f32.mrf.mxu0
    %v1313 = vadd.f32 %v1275, %v1312
    %v1314 = vpop.f32.mrf.mxu0
    %1315 = vdwg.mxu0
    %v1316 = vsel %vm692, %v1313, 0.0
    %v1317 = vrot.slane %v1316, 4
    %v1318 = vadd.f32 %v1316, %v1317
    %v1319 = vrot.slane %v1318, 2
    %v1320 = vadd.f32 %v1318, %v1319
    %v1321 = vrot.slane %v1320, 1
    %v1322 = vadd.f32 %v1320, %v1321
    %v1323 = vmul.f32 %v1322, %v721
    %v1324 = vsub.f32 %v1313, %v1323
    %v1325 = vmul.f32 %v1324, %v1324
    %v1326 = vsel %vm692, %v1325, 0.0
    %v1327 = vrot.slane %v1326, 4
    %v1328 = vadd.f32 %v1326, %v1327
    %v1329 = vrot.slane %v1328, 2
    %v1330 = vadd.f32 %v1328, %v1329
    %v1331 = vrot.slane %v1330, 1
    %v1332 = vadd.f32 %v1330, %v1331
    %v1333 = vmul.f32 %v1332, %v721
    %v1334 = vadd.f32 %v1333, 1e-05
    %v1335 = vrsqrt.pop %v1334
    %v1336 = vmul.f32 %v1335, %v1334
    %v1337 = vmul.f32 %v1336, %v1335
    %v1338 = vmul.f32 0.5, %v1337
    %v1339 = vsub.f32 1.5, %v1338
    %v1340 = vmul.f32 %v1335, %v1339
    %vm1341 = vweird.f32 %v1334
    %vm1342 = vweird.f32 %v1335
    %vm1343 = vmor %vm1341, %vm1342
    %v1344 = vsel %vm1343, %v1335, %v1340
    %v1345 = vmul.f32 %v699, %v1344
    %v1346 = vperm.slane %v1345, 7
    %v1347 = vmul.f32 %v1324, %v1346
    %v1348 = vperm.slane %v700, 7
    %v1349 = vadd.f32 %v1347, %v1348
    %v1350 = vmax.f32 %v1349, 0.0
    %v1351 = vpack.c.bf16 %v1350, %v1350
    %v1352 = vld [vmem:[%s7] sm:$0xf]
    %v1353 = vld [vmem:[%s7 + $0x4] sm:$0xf]
    %v1354 = vld [vmem:[%s7 + $0x8] sm:$0xf]
    %v1355 = vld [vmem:[%s7 + $0xc] sm:$0xf]
    %v1356 = vld [vmem:[%s7 + $0x10] sm:$0xf]
    %v1357 = vld [vmem:[%s7 + $0x14] sm:$0xf]
    %v1358 = vld [vmem:[%s7 + $0x18] sm:$0xf]
    %v1359 = vld [vmem:[%s7 + $0x1c] sm:$0xf]
    %v1360 = vld [vmem:[%s8] sm:$0x1]
    %v1362 = vperm.slane %v1360, 0
    %v1372 = vunpack.c.l.b16 %v1352
    %v1373 = vunpack.c.l.b16 %v1353
    %v1374 = vunpack.c.l.b16 %v1354
    %v1375 = vunpack.c.l.b16 %v1355
    %v1376 = vunpack.c.l.b16 %v1356
    %v1377 = vunpack.c.l.b16 %v1357
    %v1378 = vunpack.c.l.b16 %v1358
    %v1379 = vunpack.c.l.b16 %v1359
    %v1380 = vpack.c.b16 %v1373, %v1372
    %v1381 = vpack.c.b16 %v1375, %v1374
    %v1382 = vpack.c.b16 %v1377, %v1376
    %v1383 = vpack.c.b16 %v1379, %v1378
    %v1389 = vsel %vm692, %v1351, 0
    %1391 = vmatpush.bf16.msra.mxu0 0
    %1392 = vmatpush.bf16.msra.mxu0 0
    %1393 = vmatpush.bf16.msra.mxu0 0
    %1394 = vmatpush.bf16.msra.mxu0 0
    %1395 = vmatpush.bf16.msra.mxu0 %v1383
    %1396 = vmatpush.bf16.msra.mxu0 %v1382
    %1397 = vmatpush.bf16.msra.mxu0 %v1381
    %1398 = vmatpush.bf16.msra.mxu0 %v1380
    %1399 = vmatmul.bf16.gmra.mxu0 %v1389
    %v1400 = vpop.f32.mrf.mxu0
    %v1401 = vadd.f32 %v1362, %v1400
    %v1402 = vpop.f32.mrf.mxu0
    %1403 = vdwg.mxu0
    %v1404 = vpack.c.bf16 %v1401, %v1401
    %1405 = vst [vmem:[%s9] sm:$0xf] %v1404
  $region45: #{mlp_forward.1} parent=0 // pred_fallthru
    _
  // Predicated region
  $region46: #{mlp_forward.1} parent=0 // pred_check
    _
  $region47: #{mlp_forward.1} parent=0 // pred_check_branch
    %1407 = sbr.rel (0) target = $region49
  $region48: #{mlp_forward.1} parent=0 // pred_region
    _
  $region49: #{mlp_forward.1} parent=0 // pred_fallthru
    _
  // Predicated region
  $region50: #{mlp_forward.1} parent=0 // pred_check
    _
  $region51: #{mlp_forward.1} parent=0 // pred_check_branch
    %1409 = sbr.rel (0) target = $region53
  $region52: #{mlp_forward.1} parent=0 // pred_region
    _
  $region53: #{mlp_forward.1} parent=0 // pred_fallthru
    _

</llo_original>
